<compile_context>
chip_gen: v7x
topology: tpu7x:2x2x1
jax: 0.10.0
libtpu: 0.0.40
codegen_flags: <defaults>
</compile_context>

<pallas_src>
import functools
import math

import jax
import jax.numpy as jnp
import numpy as np
from jax import lax
from jax.experimental import pallas as pl
from jax.experimental.pallas import tpu as pltpu

LN_EPS = 1e-5  # torch.nn.LayerNorm default


def _gelu_tanh(x):
    # GPT-2 style tanh-approximate GELU (EUP tanh); within ~1e-3 of exact erf GELU.
    c = math.sqrt(2.0 / math.pi)
    return 0.5 * x * (1.0 + jnp.tanh(c * (x + 0.044715 * x * x * x)))


def _layernorm(h, w, b):
    mu = jnp.mean(h, axis=-1, keepdims=True)
    var = jnp.mean(jnp.square(h - mu), axis=-1, keepdims=True)
    return (h - mu) * lax.rsqrt(var + LN_EPS) * w + b


def block_kernel(n_head,
                 x_ref,
                 ln1w_ref, ln1b_ref,
                 wqkv_ref, bqkv_ref,
                 wo_ref, bo_ref,
                 ln2w_ref, ln2b_ref,
                 wfc_ref, bfc_ref,
                 wpr_ref, bpr_ref,
                 o_ref):
    bf16 = jnp.bfloat16
    x = x_ref[0]                       # (T, C) f32 tile for the current batch element
    T, C = x.shape
    hd = C // n_head
    scale = 1.0 / math.sqrt(hd)

    # ---- attention branch: x + attn(ln_1(x)) ----
    h = _layernorm(x, ln1w_ref[0], ln1b_ref[0])
    qkv = jnp.dot(h.astype(bf16), wqkv_ref[...],
                  preferred_element_type=jnp.float32) + bqkv_ref[0]       # (T, 3C) f32
    qkv_b = qkv.astype(bf16)

    # Head-batched (n_head, T, hd) layout, built once from qkv (bf16).
    q = jnp.stack([qkv_b[:, 0 * C + i * hd: 0 * C + (i + 1) * hd]
                   for i in range(n_head)], axis=0)
    k = jnp.stack([qkv_b[:, 1 * C + i * hd: 1 * C + (i + 1) * hd]
                   for i in range(n_head)], axis=0)
    v = jnp.stack([qkv_b[:, 2 * C + i * hd: 2 * C + (i + 1) * hd]
                   for i in range(n_head)], axis=0)

    # Scores for all heads in one batched dot_general; contracts last dims -> no k.T.
    s = jnp.einsum('htd,hsd->hts', q, k,
                   preferred_element_type=jnp.float32) * scale            # (H, T, T) f32

    row = lax.broadcasted_iota(jnp.int32, (T, T), 0)
    col = lax.broadcasted_iota(jnp.int32, (T, T), 1)
    causal = (col <= row)[None]                                           # (1, T, T)
    s = jnp.where(causal, s, -1e30)

    s_max = jnp.max(s, axis=-1, keepdims=True)
    p = jnp.exp(s - s_max)
    denom = jnp.sum(p, axis=-1, keepdims=True)
    p = p * pl.reciprocal(denom, approx=True)           # EUP reciprocal, not VPU divide

    y = jnp.einsum('hts,hsd->htd', p.astype(bf16), v,
                   preferred_element_type=jnp.float32)                    # (H, T, hd) f32

    y_cat = jnp.concatenate([y[i] for i in range(n_head)], axis=-1)       # (T, C)
    attn = jnp.dot(y_cat.astype(bf16), wo_ref[...],
                   preferred_element_type=jnp.float32) + bo_ref[0]
    x1 = x + attn                      # resid_dropout is identity (p=0 / eval)

    # ---- MLP branch: x1 + mlp(ln_2(x1)) ----
    h2 = _layernorm(x1, ln2w_ref[0], ln2b_ref[0])
    f = jnp.dot(h2.astype(bf16), wfc_ref[...],
                preferred_element_type=jnp.float32) + bfc_ref[0]          # (T, 4C)
    f = _gelu_tanh(f)
    mlp_out = jnp.dot(f.astype(bf16), wpr_ref[...],
                      preferred_element_type=jnp.float32) + bpr_ref[0]
    o_ref[0] = x1 + mlp_out


def transformer_block(x, params, n_head):
    B, T, C = x.shape
    assert C % n_head == 0, "n_embd must be divisible by n_head"

    bf16 = jnp.bfloat16
    # Matmul weights stored bf16 (halves VMEM residency + HBM traffic); LN params
    # and biases stay f32 (added to f32 accumulators).
    weight_args = (params['ln1_w'], params['ln1_b'],
                   params['w_qkv'].astype(bf16), params['b_qkv'],
                   params['w_o'].astype(bf16), params['b_o'],
                   params['ln2_w'], params['ln2_b'],
                   params['w_fc'].astype(bf16), params['b_fc'],
                   params['w_pr'].astype(bf16), params['b_pr'])

    def const_spec(arr):
        # Constant index_map across the grid -> the block never changes; single-buffer
        # it instead of the default double-buffering to halve weight VMEM pressure.
        nd = arr.ndim
        return pl.BlockSpec(arr.shape, lambda b, _nd=nd: (0,) * _nd,
                            pipeline_mode=pl.Buffered(1))

    in_specs = ([pl.BlockSpec((1, T, C), lambda b: (b, 0, 0))] +
                [const_spec(w) for w in weight_args])

    # Explicit VMEM budget: single-buffered weights + double-buffered activation
    # tiles + in-kernel intermediates, with 2x headroom, clamped to [16, 64] MiB
    # (64 MiB is safe on all of v5e / v6e / v7x).
    w_bytes = sum(int(np.prod(w.shape)) * jnp.dtype(w.dtype).itemsize
                  for w in weight_args)
    act_bytes = 2 * 2 * T * C * 4                                  # x in + out, 2-deep
    inter_bytes = (3 * T * C * 6          # qkv f32 + bf16 + q/k/v stacks
                   + 2 * n_head * T * T * 4 + n_head * T * T * 2   # s, p, p_bf16
                   + 4 * T * C * 6        # MLP hidden f32 + bf16
                   + 6 * T * C * 4)       # LN temporaries, y, residuals
    vmem_limit = int(min(max(2 * (w_bytes + act_bytes + inter_bytes), 16 * 2**20),
                         64 * 2**20))

    return pl.pallas_call(
        functools.partial(block_kernel, n_head),
        out_shape=jax.ShapeDtypeStruct((B, T, C), jnp.float32),
        grid=(B,),
        in_specs=in_specs,
        out_specs=pl.BlockSpec((1, T, C), lambda b: (b, 0, 0)),
        compiler_params=pltpu.CompilerParams(
            dimension_semantics=("parallel",),        # shard batch across TCs on v7x
            vmem_limit_bytes=vmem_limit),
    )(x, *weight_args)


def block_ref(x, params, n_head):
    """Plain-JAX f32 reference mirroring the PyTorch module (eval mode, exact GELU)."""
    from jax.scipy.special import erf

    def ln(h, w, b):
        mu = h.mean(-1, keepdims=True)
        var = ((h - mu) ** 2).mean(-1, keepdims=True)
        return (h - mu) / jnp.sqrt(var + LN_EPS) * w + b

    B, T, C = x.shape
    hd = C // n_head
    h = ln(x, params['ln1_w'][0], params['ln1_b'][0])
    qkv = h @ params['w_qkv'] + params['b_qkv'][0]
    q, k, v = jnp.split(qkv, 3, axis=-1)
    q = q.reshape(B, T, n_head, hd).transpose(0, 2, 1, 3)
    k = k.reshape(B, T, n_head, hd).transpose(0, 2, 1, 3)
    v = v.reshape(B, T, n_head, hd).transpose(0, 2, 1, 3)
    s = jnp.einsum('bhtd,bhsd->bhts', q, k) / math.sqrt(hd)
    mask = jnp.tril(jnp.ones((T, T), dtype=bool))
    s = jnp.where(mask, s, -jnp.inf)
    p = jax.nn.softmax(s, axis=-1)
    y = jnp.einsum('bhts,bhsd->bhtd', p, v).transpose(0, 2, 1, 3).reshape(B, T, C)
    y = y @ params['w_o'] + params['b_o'][0]
    x1 = x + y
    h2 = ln(x1, params['ln2_w'][0], params['ln2_b'][0])
    f = h2 @ params['w_fc'] + params['b_fc'][0]
    f = 0.5 * f * (1.0 + erf(f / math.sqrt(2.0)))
    return x1 + f @ params['w_pr'] + params['b_pr'][0]


def init_params(key, n_embd):
    ks = jax.random.split(key, 4)
    C = n_embd
    std = 0.02
    return {
        'ln1_w': jnp.ones((1, C), jnp.float32),
        'ln1_b': jnp.zeros((1, C), jnp.float32),
        'w_qkv': std * jax.random.normal(ks[0], (C, 3 * C), jnp.float32),
        'b_qkv': jnp.zeros((1, 3 * C), jnp.float32),
        'w_o':   std * jax.random.normal(ks[1], (C, C), jnp.float32),
        'b_o':   jnp.zeros((1, C), jnp.float32),
        'ln2_w': jnp.ones((1, C), jnp.float32),
        'ln2_b': jnp.zeros((1, C), jnp.float32),
        'w_fc':  std * jax.random.normal(ks[2], (C, 4 * C), jnp.float32),
        'b_fc':  jnp.zeros((1, 4 * C), jnp.float32),
        'w_pr':  std * jax.random.normal(ks[3], (4 * C, C), jnp.float32),
        'b_pr':  jnp.zeros((1, C), jnp.float32),
    }


if __name__ == "__main__":
    B, T, C, n_head = 2, 8, 32, 4   # batch, seq (block_size), n_embd, n_head
    key = jax.random.PRNGKey(0)
    kx, kp = jax.random.split(key)
    x = jax.random.normal(kx, (B, T, C), jnp.float32)
    params = init_params(kp, C)

    out = transformer_block(x, params, n_head)
    out = jax.block_until_ready(out)

    ref = block_ref(x, params, n_head)
    # Tolerance widened vs. the pure-f32 version: bf16 matmul inputs (f32 accum),
    # tanh-approx GELU, and EUP approx-reciprocal softmax shift numerics slightly.
    np.testing.assert_allclose(np.asarray(out), np.asarray(ref),
                               rtol=2e-2, atol=2e-2)
    print("KERNEL_OK")
</pallas_src>

<mosaic_0001>
module attributes {stable_mosaic.version = 11 : i64} {
  func.func @block_kernel(%arg0: i32, %arg1: memref<1x8x32xf32, #tpu.memory_space<vmem>>, %arg2: memref<1x32xf32, #tpu.memory_space<vmem>>, %arg3: memref<1x32xf32, #tpu.memory_space<vmem>>, %arg4: memref<32x96xbf16, #tpu.memory_space<vmem>>, %arg5: memref<1x96xf32, #tpu.memory_space<vmem>>, %arg6: memref<32x32xbf16, #tpu.memory_space<vmem>>, %arg7: memref<1x32xf32, #tpu.memory_space<vmem>>, %arg8: memref<1x32xf32, #tpu.memory_space<vmem>>, %arg9: memref<1x32xf32, #tpu.memory_space<vmem>>, %arg10: memref<32x128xbf16, #tpu.memory_space<vmem>>, %arg11: memref<1x128xf32, #tpu.memory_space<vmem>>, %arg12: memref<128x32xbf16, #tpu.memory_space<vmem>>, %arg13: memref<1x32xf32, #tpu.memory_space<vmem>>, %arg14: memref<1x8x32xf32, #tpu.memory_space<vmem>>) attributes {dimension_semantics = [#tpu.dimension_semantics<parallel>], iteration_bounds = array<i64: 2>, scalar_prefetch = 0 : i64, scratch_operands = 0 : i64, tpu.core_type = #tpu.core_type<tc>, window_params = [{transform_indices = @transform_0, window_bounds = array<i64: 1, 8, 32>}, {pipeline_mode = #tpu.pipeline_mode<synchronous>, transform_indices = @transform_1, window_bounds = array<i64: 1, 32>}, {pipeline_mode = #tpu.pipeline_mode<synchronous>, transform_indices = @transform_2, window_bounds = array<i64: 1, 32>}, {pipeline_mode = #tpu.pipeline_mode<synchronous>, transform_indices = @transform_3, window_bounds = array<i64: 32, 96>}, {pipeline_mode = #tpu.pipeline_mode<synchronous>, transform_indices = @transform_4, window_bounds = array<i64: 1, 96>}, {pipeline_mode = #tpu.pipeline_mode<synchronous>, transform_indices = @transform_5, window_bounds = array<i64: 32, 32>}, {pipeline_mode = #tpu.pipeline_mode<synchronous>, transform_indices = @transform_6, window_bounds = array<i64: 1, 32>}, {pipeline_mode = #tpu.pipeline_mode<synchronous>, transform_indices = @transform_7, window_bounds = array<i64: 1, 32>}, {pipeline_mode = #tpu.pipeline_mode<synchronous>, transform_indices = @transform_8, window_bounds = array<i64: 1, 32>}, {pipeline_mode = #tpu.pipeline_mode<synchronous>, transform_indices = @transform_9, window_bounds = array<i64: 32, 128>}, {pipeline_mode = #tpu.pipeline_mode<synchronous>, transform_indices = @transform_10, window_bounds = array<i64: 1, 128>}, {pipeline_mode = #tpu.pipeline_mode<synchronous>, transform_indices = @transform_11, window_bounds = array<i64: 128, 32>}, {pipeline_mode = #tpu.pipeline_mode<synchronous>, transform_indices = @transform_12, window_bounds = array<i64: 1, 32>}, {transform_indices = @transform_13, window_bounds = array<i64: 1, 8, 32>}]} {
    %c0 = arith.constant 0 : index
    %c0_0 = arith.constant 0 : index
    %c0_1 = arith.constant 0 : index
    %0 = vector.load %arg1[%c0, %c0_0, %c0_1] : memref<1x8x32xf32, #tpu.memory_space<vmem>>, vector<1x8x32xf32>
    %1 = vector.shape_cast %0 : vector<1x8x32xf32> to vector<8x32xf32>
    %c0_2 = arith.constant 0 : index
    %c0_3 = arith.constant 0 : index
    %2 = vector.load %arg2[%c0_2, %c0_3] : memref<1x32xf32, #tpu.memory_space<vmem>>, vector<1x32xf32>
    %3 = vector.shape_cast %2 : vector<1x32xf32> to vector<32xf32>
    %c0_4 = arith.constant 0 : index
    %c0_5 = arith.constant 0 : index
    %4 = vector.load %arg3[%c0_4, %c0_5] : memref<1x32xf32, #tpu.memory_space<vmem>>, vector<1x32xf32>
    %5 = vector.shape_cast %4 : vector<1x32xf32> to vector<32xf32>
    %cst = arith.constant dense<0.000000e+00> : vector<8xf32>
    %6 = vector.multi_reduction <add>, %1, %cst [1] : vector<8x32xf32> to vector<8xf32>
    %7 = vector.shape_cast %6 : vector<8xf32> to vector<8x1xf32>
    %cst_6 = arith.constant 3.200000e+01 : f32
    %8 = vector.broadcast %cst_6 : f32 to vector<8x1xf32>
    %9 = arith.divf %7, %8 : vector<8x1xf32>
    %10 = vector.broadcast %9 : vector<8x1xf32> to vector<8x32xf32>
    %11 = arith.subf %1, %10 : vector<8x32xf32>
    %12 = arith.mulf %11, %11 : vector<8x32xf32>
    %cst_7 = arith.constant dense<0.000000e+00> : vector<8xf32>
    %13 = vector.multi_reduction <add>, %12, %cst_7 [1] : vector<8x32xf32> to vector<8xf32>
    %14 = vector.shape_cast %13 : vector<8xf32> to vector<8x1xf32>
    %cst_8 = arith.constant 3.200000e+01 : f32
    %15 = vector.broadcast %cst_8 : f32 to vector<8x1xf32>
    %16 = arith.divf %14, %15 : vector<8x1xf32>
    %17 = vector.broadcast %9 : vector<8x1xf32> to vector<8x32xf32>
    %18 = arith.subf %1, %17 : vector<8x32xf32>
    %cst_9 = arith.constant 9.99999974E-6 : f32
    %19 = vector.broadcast %cst_9 : f32 to vector<8x1xf32>
    %20 = arith.addf %16, %19 : vector<8x1xf32>
    %21 = math.rsqrt %20 : vector<8x1xf32>
    %22 = vector.broadcast %21 : vector<8x1xf32> to vector<8x32xf32>
    %23 = arith.mulf %18, %22 : vector<8x32xf32>
    %24 = vector.shape_cast %3 : vector<32xf32> to vector<1x32xf32>
    %25 = vector.broadcast %24 : vector<1x32xf32> to vector<8x32xf32>
    %26 = arith.mulf %23, %25 : vector<8x32xf32>
    %27 = vector.shape_cast %5 : vector<32xf32> to vector<1x32xf32>
    %28 = vector.broadcast %27 : vector<1x32xf32> to vector<8x32xf32>
    %29 = arith.addf %26, %28 : vector<8x32xf32>
    %30 = arith.truncf %29 : vector<8x32xf32> to vector<8x32xbf16>
    %c0_10 = arith.constant 0 : index
    %c0_11 = arith.constant 0 : index
    %31 = vector.load %arg4[%c0_10, %c0_11] : memref<32x96xbf16, #tpu.memory_space<vmem>>, vector<32x96xbf16>
    %cst_12 = arith.constant dense<0.000000e+00> : vector<8x96xf32>
    %32 = tpu.matmul %30, %31, %cst_12 {dimension_numbers = #tpu.dot_dimension_numbers<[1], [0], [0], [1], [0, 0, 1, 1], [], []>} : vector<8x32xbf16>, vector<32x96xbf16>, vector<8x96xf32> -> vector<8x96xf32>
    %c0_13 = arith.constant 0 : index
    %c0_14 = arith.constant 0 : index
    %33 = vector.load %arg5[%c0_13, %c0_14] : memref<1x96xf32, #tpu.memory_space<vmem>>, vector<1x96xf32>
    %34 = vector.shape_cast %33 : vector<1x96xf32> to vector<96xf32>
    %35 = vector.shape_cast %34 : vector<96xf32> to vector<1x96xf32>
    %36 = vector.broadcast %35 : vector<1x96xf32> to vector<8x96xf32>
    %37 = arith.addf %32, %36 : vector<8x96xf32>
    %38 = arith.truncf %37 : vector<8x96xf32> to vector<8x96xbf16>
    %39 = vector.extract_strided_slice %38 {offsets = [0, 0], sizes = [8, 8], strides = [1, 1]} : vector<8x96xbf16> to vector<8x8xbf16>
    %40 = vector.extract_strided_slice %38 {offsets = [0, 8], sizes = [8, 8], strides = [1, 1]} : vector<8x96xbf16> to vector<8x8xbf16>
    %41 = vector.extract_strided_slice %38 {offsets = [0, 16], sizes = [8, 8], strides = [1, 1]} : vector<8x96xbf16> to vector<8x8xbf16>
    %42 = vector.extract_strided_slice %38 {offsets = [0, 24], sizes = [8, 8], strides = [1, 1]} : vector<8x96xbf16> to vector<8x8xbf16>
    %43 = vector.shape_cast %39 : vector<8x8xbf16> to vector<1x8x8xbf16>
    %44 = vector.shape_cast %40 : vector<8x8xbf16> to vector<1x8x8xbf16>
    %45 = vector.shape_cast %41 : vector<8x8xbf16> to vector<1x8x8xbf16>
    %46 = vector.shape_cast %42 : vector<8x8xbf16> to vector<1x8x8xbf16>
    %47 = tpu.concatenate %43, %44, %45, %46 in 0 : vector<1x8x8xbf16>, vector<1x8x8xbf16>, vector<1x8x8xbf16>, vector<1x8x8xbf16> -> vector<4x8x8xbf16>
    %48 = vector.extract_strided_slice %38 {offsets = [0, 32], sizes = [8, 8], strides = [1, 1]} : vector<8x96xbf16> to vector<8x8xbf16>
    %49 = vector.extract_strided_slice %38 {offsets = [0, 40], sizes = [8, 8], strides = [1, 1]} : vector<8x96xbf16> to vector<8x8xbf16>
    %50 = vector.extract_strided_slice %38 {offsets = [0, 48], sizes = [8, 8], strides = [1, 1]} : vector<8x96xbf16> to vector<8x8xbf16>
    %51 = vector.extract_strided_slice %38 {offsets = [0, 56], sizes = [8, 8], strides = [1, 1]} : vector<8x96xbf16> to vector<8x8xbf16>
    %52 = vector.shape_cast %48 : vector<8x8xbf16> to vector<1x8x8xbf16>
    %53 = vector.shape_cast %49 : vector<8x8xbf16> to vector<1x8x8xbf16>
    %54 = vector.shape_cast %50 : vector<8x8xbf16> to vector<1x8x8xbf16>
    %55 = vector.shape_cast %51 : vector<8x8xbf16> to vector<1x8x8xbf16>
    %56 = tpu.concatenate %52, %53, %54, %55 in 0 : vector<1x8x8xbf16>, vector<1x8x8xbf16>, vector<1x8x8xbf16>, vector<1x8x8xbf16> -> vector<4x8x8xbf16>
    %57 = vector.extract_strided_slice %38 {offsets = [0, 64], sizes = [8, 8], strides = [1, 1]} : vector<8x96xbf16> to vector<8x8xbf16>
    %58 = vector.extract_strided_slice %38 {offsets = [0, 72], sizes = [8, 8], strides = [1, 1]} : vector<8x96xbf16> to vector<8x8xbf16>
    %59 = vector.extract_strided_slice %38 {offsets = [0, 80], sizes = [8, 8], strides = [1, 1]} : vector<8x96xbf16> to vector<8x8xbf16>
    %60 = vector.extract_strided_slice %38 {offsets = [0, 88], sizes = [8, 8], strides = [1, 1]} : vector<8x96xbf16> to vector<8x8xbf16>
    %61 = vector.shape_cast %57 : vector<8x8xbf16> to vector<1x8x8xbf16>
    %62 = vector.shape_cast %58 : vector<8x8xbf16> to vector<1x8x8xbf16>
    %63 = vector.shape_cast %59 : vector<8x8xbf16> to vector<1x8x8xbf16>
    %64 = vector.shape_cast %60 : vector<8x8xbf16> to vector<1x8x8xbf16>
    %65 = tpu.concatenate %61, %62, %63, %64 in 0 : vector<1x8x8xbf16>, vector<1x8x8xbf16>, vector<1x8x8xbf16>, vector<1x8x8xbf16> -> vector<4x8x8xbf16>
    "tpu.trace_start"() <{level = 10 : i32, message = "htd,hsd->hts"}> : () -> ()
    %cst_15 = arith.constant dense<0.000000e+00> : vector<4x8x8xf32>
    %66 = tpu.matmul %47, %56, %cst_15 {dimension_numbers = #tpu.dot_dimension_numbers<[2], [2], [1], [1], [0, 0, 0, 1, 1, 1], [0], [0]>} : vector<4x8x8xbf16>, vector<4x8x8xbf16>, vector<4x8x8xf32> -> vector<4x8x8xf32>
    "tpu.trace_stop"() : () -> ()
    %cst_16 = arith.constant 0.353553385 : f32
    %67 = vector.broadcast %cst_16 : f32 to vector<4x8x8xf32>
    %68 = arith.mulf %66, %67 : vector<4x8x8xf32>
    %69 = tpu.iota {dimensions = array<i32: 0>} : vector<8x8xi32>
    %70 = tpu.iota {dimensions = array<i32: 1>} : vector<8x8xi32>
    %71 = arith.cmpi sle, %70, %69 : vector<8x8xi32>
    %72 = vector.shape_cast %71 : vector<8x8xi1> to vector<1x8x8xi1>
    %cst_17 = arith.constant -1.000000e+30 : f32
    %73 = vector.shape_cast %72 : vector<1x8x8xi1> to vector<1x8x8xi1>
    %74 = vector.broadcast %73 : vector<1x8x8xi1> to vector<4x8x8xi1>
    %75 = vector.broadcast %cst_17 : f32 to vector<4x8x8xf32>
    %76 = arith.select %74, %68, %75 : vector<4x8x8xi1>, vector<4x8x8xf32>
    %cst_18 = arith.constant dense<0xFF800000> : vector<4x8xf32>
    %77 = vector.multi_reduction <maximumf>, %76, %cst_18 [2] : vector<4x8x8xf32> to vector<4x8xf32>
    %78 = vector.shape_cast %77 : vector<4x8xf32> to vector<4x8x1xf32>
    %79 = vector.broadcast %78 : vector<4x8x1xf32> to vector<4x8x8xf32>
    %80 = arith.subf %76, %79 : vector<4x8x8xf32>
    %81 = math.exp %80 : vector<4x8x8xf32>
    %cst_19 = arith.constant dense<0.000000e+00> : vector<4x8xf32>
    %82 = vector.multi_reduction <add>, %81, %cst_19 [2] : vector<4x8x8xf32> to vector<4x8xf32>
    %83 = vector.shape_cast %82 : vector<4x8xf32> to vector<4x8x1xf32>
    %84 = tpu.reciprocal %83 {approx = true} : vector<4x8x1xf32> -> vector<4x8x1xf32>
    %85 = vector.broadcast %84 : vector<4x8x1xf32> to vector<4x8x8xf32>
    %86 = arith.mulf %81, %85 : vector<4x8x8xf32>
    %87 = arith.truncf %86 : vector<4x8x8xf32> to vector<4x8x8xbf16>
    "tpu.trace_start"() <{level = 10 : i32, message = "hts,hsd->htd"}> : () -> ()
    %cst_20 = arith.constant dense<0.000000e+00> : vector<4x8x8xf32>
    %88 = tpu.matmul %87, %65, %cst_20 {dimension_numbers = #tpu.dot_dimension_numbers<[2], [1], [1], [2], [0, 0, 0, 1, 1, 2], [0], [0]>} : vector<4x8x8xbf16>, vector<4x8x8xbf16>, vector<4x8x8xf32> -> vector<4x8x8xf32>
    "tpu.trace_stop"() : () -> ()
    %89 = vector.extract_strided_slice %88 {offsets = [0, 0, 0], sizes = [1, 8, 8], strides = [1, 1, 1]} : vector<4x8x8xf32> to vector<1x8x8xf32>
    %90 = vector.shape_cast %89 : vector<1x8x8xf32> to vector<8x8xf32>
    %91 = vector.extract_strided_slice %88 {offsets = [1, 0, 0], sizes = [1, 8, 8], strides = [1, 1, 1]} : vector<4x8x8xf32> to vector<1x8x8xf32>
    %92 = vector.shape_cast %91 : vector<1x8x8xf32> to vector<8x8xf32>
    %93 = vector.extract_strided_slice %88 {offsets = [2, 0, 0], sizes = [1, 8, 8], strides = [1, 1, 1]} : vector<4x8x8xf32> to vector<1x8x8xf32>
    %94 = vector.shape_cast %93 : vector<1x8x8xf32> to vector<8x8xf32>
    %95 = vector.extract_strided_slice %88 {offsets = [3, 0, 0], sizes = [1, 8, 8], strides = [1, 1, 1]} : vector<4x8x8xf32> to vector<1x8x8xf32>
    %96 = vector.shape_cast %95 : vector<1x8x8xf32> to vector<8x8xf32>
    %97 = tpu.concatenate %90, %92, %94, %96 in 1 : vector<8x8xf32>, vector<8x8xf32>, vector<8x8xf32>, vector<8x8xf32> -> vector<8x32xf32>
    %98 = arith.truncf %97 : vector<8x32xf32> to vector<8x32xbf16>
    %c0_21 = arith.constant 0 : index
    %c0_22 = arith.constant 0 : index
    %99 = vector.load %arg6[%c0_21, %c0_22] : memref<32x32xbf16, #tpu.memory_space<vmem>>, vector<32x32xbf16>
    %cst_23 = arith.constant dense<0.000000e+00> : vector<8x32xf32>
    %100 = tpu.matmul %98, %99, %cst_23 {dimension_numbers = #tpu.dot_dimension_numbers<[1], [0], [0], [1], [0, 0, 1, 1], [], []>} : vector<8x32xbf16>, vector<32x32xbf16>, vector<8x32xf32> -> vector<8x32xf32>
    %c0_24 = arith.constant 0 : index
    %c0_25 = arith.constant 0 : index
    %101 = vector.load %arg7[%c0_24, %c0_25] : memref<1x32xf32, #tpu.memory_space<vmem>>, vector<1x32xf32>
    %102 = vector.shape_cast %101 : vector<1x32xf32> to vector<32xf32>
    %103 = vector.shape_cast %102 : vector<32xf32> to vector<1x32xf32>
    %104 = vector.broadcast %103 : vector<1x32xf32> to vector<8x32xf32>
    %105 = arith.addf %100, %104 : vector<8x32xf32>
    %106 = arith.addf %1, %105 : vector<8x32xf32>
    %c0_26 = arith.constant 0 : index
    %c0_27 = arith.constant 0 : index
    %107 = vector.load %arg8[%c0_26, %c0_27] : memref<1x32xf32, #tpu.memory_space<vmem>>, vector<1x32xf32>
    %108 = vector.shape_cast %107 : vector<1x32xf32> to vector<32xf32>
    %c0_28 = arith.constant 0 : index
    %c0_29 = arith.constant 0 : index
    %109 = vector.load %arg9[%c0_28, %c0_29] : memref<1x32xf32, #tpu.memory_space<vmem>>, vector<1x32xf32>
    %110 = vector.shape_cast %109 : vector<1x32xf32> to vector<32xf32>
    %cst_30 = arith.constant dense<0.000000e+00> : vector<8xf32>
    %111 = vector.multi_reduction <add>, %106, %cst_30 [1] : vector<8x32xf32> to vector<8xf32>
    %112 = vector.shape_cast %111 : vector<8xf32> to vector<8x1xf32>
    %cst_31 = arith.constant 3.200000e+01 : f32
    %113 = vector.broadcast %cst_31 : f32 to vector<8x1xf32>
    %114 = arith.divf %112, %113 : vector<8x1xf32>
    %115 = vector.broadcast %114 : vector<8x1xf32> to vector<8x32xf32>
    %116 = arith.subf %106, %115 : vector<8x32xf32>
    %117 = arith.mulf %116, %116 : vector<8x32xf32>
    %cst_32 = arith.constant dense<0.000000e+00> : vector<8xf32>
    %118 = vector.multi_reduction <add>, %117, %cst_32 [1] : vector<8x32xf32> to vector<8xf32>
    %119 = vector.shape_cast %118 : vector<8xf32> to vector<8x1xf32>
    %cst_33 = arith.constant 3.200000e+01 : f32
    %120 = vector.broadcast %cst_33 : f32 to vector<8x1xf32>
    %121 = arith.divf %119, %120 : vector<8x1xf32>
    %122 = vector.broadcast %114 : vector<8x1xf32> to vector<8x32xf32>
    %123 = arith.subf %106, %122 : vector<8x32xf32>
    %cst_34 = arith.constant 9.99999974E-6 : f32
    %124 = vector.broadcast %cst_34 : f32 to vector<8x1xf32>
    %125 = arith.addf %121, %124 : vector<8x1xf32>
    %126 = math.rsqrt %125 : vector<8x1xf32>
    %127 = vector.broadcast %126 : vector<8x1xf32> to vector<8x32xf32>
    %128 = arith.mulf %123, %127 : vector<8x32xf32>
    %129 = vector.shape_cast %108 : vector<32xf32> to vector<1x32xf32>
    %130 = vector.broadcast %129 : vector<1x32xf32> to vector<8x32xf32>
    %131 = arith.mulf %128, %130 : vector<8x32xf32>
    %132 = vector.shape_cast %110 : vector<32xf32> to vector<1x32xf32>
    %133 = vector.broadcast %132 : vector<1x32xf32> to vector<8x32xf32>
    %134 = arith.addf %131, %133 : vector<8x32xf32>
    %135 = arith.truncf %134 : vector<8x32xf32> to vector<8x32xbf16>
    %c0_35 = arith.constant 0 : index
    %c0_36 = arith.constant 0 : index
    %136 = vector.load %arg10[%c0_35, %c0_36] : memref<32x128xbf16, #tpu.memory_space<vmem>>, vector<32x128xbf16>
    %cst_37 = arith.constant dense<0.000000e+00> : vector<8x128xf32>
    %137 = tpu.matmul %135, %136, %cst_37 {dimension_numbers = #tpu.dot_dimension_numbers<[1], [0], [0], [1], [0, 0, 1, 1], [], []>} : vector<8x32xbf16>, vector<32x128xbf16>, vector<8x128xf32> -> vector<8x128xf32>
    %c0_38 = arith.constant 0 : index
    %c0_39 = arith.constant 0 : index
    %138 = vector.load %arg11[%c0_38, %c0_39] : memref<1x128xf32, #tpu.memory_space<vmem>>, vector<1x128xf32>
    %139 = vector.shape_cast %138 : vector<1x128xf32> to vector<128xf32>
    %140 = vector.shape_cast %139 : vector<128xf32> to vector<1x128xf32>
    %141 = vector.broadcast %140 : vector<1x128xf32> to vector<8x128xf32>
    %142 = arith.addf %137, %141 : vector<8x128xf32>
    %cst_40 = arith.constant 5.000000e-01 : f32
    %143 = vector.broadcast %cst_40 : f32 to vector<8x128xf32>
    %144 = arith.mulf %143, %142 : vector<8x128xf32>
    %cst_41 = arith.constant 4.471500e-02 : f32
    %145 = vector.broadcast %cst_41 : f32 to vector<8x128xf32>
    %146 = arith.mulf %145, %142 : vector<8x128xf32>
    %147 = arith.mulf %146, %142 : vector<8x128xf32>
    %148 = arith.mulf %147, %142 : vector<8x128xf32>
    %149 = arith.addf %142, %148 : vector<8x128xf32>
    %cst_42 = arith.constant 0.797884583 : f32
    %150 = vector.broadcast %cst_42 : f32 to vector<8x128xf32>
    %151 = arith.mulf %150, %149 : vector<8x128xf32>
    %152 = math.tanh %151 : vector<8x128xf32>
    %cst_43 = arith.constant 1.000000e+00 : f32
    %153 = vector.broadcast %cst_43 : f32 to vector<8x128xf32>
    %154 = arith.addf %153, %152 : vector<8x128xf32>
    %155 = arith.mulf %144, %154 : vector<8x128xf32>
    %156 = arith.truncf %155 : vector<8x128xf32> to vector<8x128xbf16>
    %c0_44 = arith.constant 0 : index
    %c0_45 = arith.constant 0 : index
    %157 = vector.load %arg12[%c0_44, %c0_45] : memref<128x32xbf16, #tpu.memory_space<vmem>>, vector<128x32xbf16>
    %cst_46 = arith.constant dense<0.000000e+00> : vector<8x32xf32>
    %158 = tpu.matmul %156, %157, %cst_46 {dimension_numbers = #tpu.dot_dimension_numbers<[1], [0], [0], [1], [0, 0, 1, 1], [], []>} : vector<8x128xbf16>, vector<128x32xbf16>, vector<8x32xf32> -> vector<8x32xf32>
    %c0_47 = arith.constant 0 : index
    %c0_48 = arith.constant 0 : index
    %159 = vector.load %arg13[%c0_47, %c0_48] : memref<1x32xf32, #tpu.memory_space<vmem>>, vector<1x32xf32>
    %160 = vector.shape_cast %159 : vector<1x32xf32> to vector<32xf32>
    %161 = vector.shape_cast %160 : vector<32xf32> to vector<1x32xf32>
    %162 = vector.broadcast %161 : vector<1x32xf32> to vector<8x32xf32>
    %163 = arith.addf %158, %162 : vector<8x32xf32>
    %164 = arith.addf %106, %163 : vector<8x32xf32>
    %c0_49 = arith.constant 0 : index
    %c0_50 = arith.constant 0 : index
    %c0_51 = arith.constant 0 : index
    %165 = vector.load %arg14[%c0_49, %c0_50, %c0_51] : memref<1x8x32xf32, #tpu.memory_space<vmem>>, vector<1x8x32xf32>
    %166 = vector.shape_cast %165 : vector<1x8x32xf32> to vector<8x32xf32>
    %167 = vector.shape_cast %164 : vector<8x32xf32> to vector<1x8x32xf32>
    tpu.vector_store %arg14[%c0_49, %c0_50, %c0_51], %167 {strides = array<i32>} : memref<1x8x32xf32, #tpu.memory_space<vmem>>, vector<1x8x32xf32>,
    return
  }
  func.func @transform_0(%arg0: i32) -> (i32, i32, i32) {
    %c0_i32 = arith.constant 0 : i32
    %c0_i32_0 = arith.constant 0 : i32
    %c0_i32_1 = arith.constant 0 : i32
    return %arg0, %c0_i32, %c0_i32_0 : i32, i32, i32
  }
  func.func @transform_1(%arg0: i32) -> (i32, i32) {
    %c0_i32 = arith.constant 0 : i32
    %c0_i32_0 = arith.constant 0 : i32
    %c0_i32_1 = arith.constant 0 : i32
    return %c0_i32, %c0_i32_0 : i32, i32
  }
  func.func @transform_2(%arg0: i32) -> (i32, i32) {
    %c0_i32 = arith.constant 0 : i32
    %c0_i32_0 = arith.constant 0 : i32
    %c0_i32_1 = arith.constant 0 : i32
    return %c0_i32, %c0_i32_0 : i32, i32
  }
  func.func @transform_3(%arg0: i32) -> (i32, i32) {
    %c0_i32 = arith.constant 0 : i32
    %c0_i32_0 = arith.constant 0 : i32
    %c0_i32_1 = arith.constant 0 : i32
    return %c0_i32, %c0_i32_0 : i32, i32
  }
  func.func @transform_4(%arg0: i32) -> (i32, i32) {
    %c0_i32 = arith.constant 0 : i32
    %c0_i32_0 = arith.constant 0 : i32
    %c0_i32_1 = arith.constant 0 : i32
    return %c0_i32, %c0_i32_0 : i32, i32
  }
  func.func @transform_5(%arg0: i32) -> (i32, i32) {
    %c0_i32 = arith.constant 0 : i32
    %c0_i32_0 = arith.constant 0 : i32
    %c0_i32_1 = arith.constant 0 : i32
    return %c0_i32, %c0_i32_0 : i32, i32
  }
  func.func @transform_6(%arg0: i32) -> (i32, i32) {
    %c0_i32 = arith.constant 0 : i32
    %c0_i32_0 = arith.constant 0 : i32
    %c0_i32_1 = arith.constant 0 : i32
    return %c0_i32, %c0_i32_0 : i32, i32
  }
  func.func @transform_7(%arg0: i32) -> (i32, i32) {
    %c0_i32 = arith.constant 0 : i32
    %c0_i32_0 = arith.constant 0 : i32
    %c0_i32_1 = arith.constant 0 : i32
    return %c0_i32, %c0_i32_0 : i32, i32
  }
  func.func @transform_8(%arg0: i32) -> (i32, i32) {
    %c0_i32 = arith.constant 0 : i32
    %c0_i32_0 = arith.constant 0 : i32
    %c0_i32_1 = arith.constant 0 : i32
    return %c0_i32, %c0_i32_0 : i32, i32
  }
  func.func @transform_9(%arg0: i32) -> (i32, i32) {
    %c0_i32 = arith.constant 0 : i32
    %c0_i32_0 = arith.constant 0 : i32
    %c0_i32_1 = arith.constant 0 : i32
    return %c0_i32, %c0_i32_0 : i32, i32
  }
  func.func @transform_10(%arg0: i32) -> (i32, i32) {
    %c0_i32 = arith.constant 0 : i32
    %c0_i32_0 = arith.constant 0 : i32
    %c0_i32_1 = arith.constant 0 : i32
    return %c0_i32, %c0_i32_0 : i32, i32
  }
  func.func @transform_11(%arg0: i32) -> (i32, i32) {
    %c0_i32 = arith.constant 0 : i32
    %c0_i32_0 = arith.constant 0 : i32
    %c0_i32_1 = arith.constant 0 : i32
    return %c0_i32, %c0_i32_0 : i32, i32
  }
  func.func @transform_12(%arg0: i32) -> (i32, i32) {
    %c0_i32 = arith.constant 0 : i32
    %c0_i32_0 = arith.constant 0 : i32
    %c0_i32_1 = arith.constant 0 : i32
    return %c0_i32, %c0_i32_0 : i32, i32
  }
  func.func @transform_13(%arg0: i32) -> (i32, i32, i32) {
    %c0_i32 = arith.constant 0 : i32
    %c0_i32_0 = arith.constant 0 : i32
    %c0_i32_1 = arith.constant 0 : i32
    return %arg0, %c0_i32, %c0_i32_0 : i32, i32, i32
  }
}

</mosaic_0001>

<llo_original>
// kernel: tpu_custom_call.1
$region0: #{tpu_custom_call.1}
  #allocation0 [shape = 'u32[]', space=smem, size = 0x4, offset = 0x4, fixed_abs, tag = 'smem constant byte address 0x4 - core index']
  #allocation1 [shape = 'u32[144,128]{1,0:T(1,128)}', space=vmem, size = 0x12000, scoped, tag = 'internal scratch']
  %s0 = inlined_call_operand.vmem [shape: f32[2,8,32], index: 0, kind: input, shape index: {}]
  %s1 = inlined_call_operand.vmem [shape: f32[1,32], index: 1, kind: input, shape index: {}]
  %s2 = inlined_call_operand.vmem [shape: f32[1,32], index: 2, kind: input, shape index: {}]
  %s3 = inlined_call_operand.vmem [shape: bf16[32,96], index: 3, kind: input, shape index: {}]
  %s4 = inlined_call_operand.vmem [shape: f32[1,96], index: 4, kind: input, shape index: {}]
  %s5 = inlined_call_operand.vmem [shape: bf16[32,32], index: 5, kind: input, shape index: {}]
  %s6 = inlined_call_operand.vmem [shape: f32[1,32], index: 6, kind: input, shape index: {}]
  %s7 = inlined_call_operand.vmem [shape: f32[1,32], index: 7, kind: input, shape index: {}]
  %s8 = inlined_call_operand.vmem [shape: f32[1,32], index: 8, kind: input, shape index: {}]
  %s9 = inlined_call_operand.vmem [shape: bf16[32,128], index: 9, kind: input, shape index: {}]
  %s10 = inlined_call_operand.vmem [shape: f32[1,128], index: 10, kind: input, shape index: {}]
  %s11 = inlined_call_operand.vmem [shape: bf16[128,32], index: 11, kind: input, shape index: {}]
  %s12 = inlined_call_operand.vmem [shape: f32[1,32], index: 12, kind: input, shape index: {}]
  %s13 = inlined_call_operand.hbm [shape: f32[2,8,32], index: 13, kind: output, shape index: {}]
  %s14 = sld [smem:[#allocation0]]
  $region85: #{tpu_custom_call.1} parent=0
    _
  %s16 = ssub.s32 1, %s14
  %s17 = scalar_select 0, %s16, %s14
  $region1: #{tpu_custom_call.1} parent=0
    #allocation2 [shape = 'u8[8192]{0}', space=vmem, size = 0x2000, scoped, tag = 'output window, operand 0']
    #allocation3 [shape = 's32[2]{0}', space=sflag, size = 0x8, scoped, tag = 'scoped memory for tpu_custom_call.1']
    %18 = vsyncpa [#allocation3], 0
    %s19 = scalar_lea.sflag [#allocation3], 1
    %20 = vsyncpa %s19, 0
    loop: start=0, step=1, limit=4
    $region2: #{tpu_custom_call.1} parent=1 // loop_pre_header
      _
    $region3: #{tpu_custom_call.1} parent=1 // loop_header
      %s22 = sphi 0, %s26
      %p23 = scmp.ge.s32.totalorder %s22, 4
      %s32 = sphi 0, %s34
      %s35 = sphi 0, %s32
      %s36 = sphi 0, %s35
      %s52 = sphi 0, %s36
      %s56 = sphi 0, %s56
      %s58 = sphi 0, %s56
      %s59 = sphi 0, %s58
      %s73 = sphi 0, %s59
      %s77 = sphi 0, %s77
      %s79 = sphi 0, %s77
      %s80 = sphi 0, %s79
      %s94 = sphi 0, %s80
      %s98 = sphi 0, %s98
      %s100 = sphi 0, %s98
      %s101 = sphi 0, %s100
      %s115 = sphi 0, %s101
      %s119 = sphi 0, %s119
      %s121 = sphi 0, %s119
      %s122 = sphi 0, %s121
      %s136 = sphi 0, %s122
      %s140 = sphi 0, %s140
      %s142 = sphi 0, %s140
      %s143 = sphi 0, %s142
      %s157 = sphi 0, %s143
      %s161 = sphi 0, %s161
      %s163 = sphi 0, %s161
      %s164 = sphi 0, %s163
      %s178 = sphi 0, %s164
      %s182 = sphi 0, %s182
      %s184 = sphi 0, %s182
      %s185 = sphi 0, %s184
      %s199 = sphi 0, %s185
      %s203 = sphi 0, %s203
      %s205 = sphi 0, %s203
      %s206 = sphi 0, %s205
      %s220 = sphi 0, %s206
      %s224 = sphi 0, %s224
      %s226 = sphi 0, %s224
      %s227 = sphi 0, %s226
      %s241 = sphi 0, %s227
      %s245 = sphi 0, %s245
      %s247 = sphi 0, %s245
      %s248 = sphi 0, %s247
      %s262 = sphi 0, %s248
      %s266 = sphi 0, %s266
      %s268 = sphi 0, %s266
      %s269 = sphi 0, %s268
      %s283 = sphi 0, %s269
      %s287 = sphi 0, %s287
      %s289 = sphi 0, %s287
      %s290 = sphi 0, %s289
      %s304 = sphi 0, %s290
      %s310 = sphi 0, %s312
      %s313 = sphi 0, %s310
      %s314 = sphi 0, %s313
      %s330 = sphi 0, %s314
    $region4: #{tpu_custom_call.1} parent=1 // loop_header_branch
      %25 = sbr.rel (%p23) target = $region8
    $region5: #{tpu_custom_call.1} parent=1 // loop_body
      %s27 = ssub.s32 %s22, 1
      %s28 = ssub.s32 %s22, 2
      %s29 = sadd.s32 %s22, 1
      %s30 = ssub.s32 %s22, %s29
      %p31 = scmp.eq.s32.totalorder %s30, 0
      %s33 = sadd.s32 %s32, 1
      %s34 = scalar_select %p31, %s32, %s33
      %p37 = pneg %p31
      %p38 = scmp.eq.s32.totalorder %s22, 1
      %p39 = por %p37, %p38
      %p40 = scmp.ne.s32.totalorder %s32, %s35
      %p41 = scmp.eq.s32.totalorder %s22, 0
      %p42 = por %p40, %p41
      %p43 = scmp.ne.s32.totalorder %s32, %s35
      %p44 = scmp.eq.s32.totalorder %s27, 1
      %p45 = por %p43, %p44
      %p46 = scmp.ne.s32.totalorder %s35, %s36
      %p47 = scmp.eq.s32.totalorder %s27, 0
      %p48 = por %p46, %p47
      %p49 = scmp.ne.s32.totalorder %s35, %s36
      %p50 = scmp.eq.s32.totalorder %s28, 1
      %p51 = por %p49, %p50
      %p53 = scmp.ne.s32.totalorder %s36, %s52
      %p54 = scmp.eq.s32.totalorder %s28, 0
      %p55 = por %p53, %p54
      %s57 = sadd.s32 %s56, 1
      %p60 = scmp.eq.s32.totalorder %s22, 1
      %p61 = scmp.ne.s32.totalorder %s56, %s58
      %p62 = scmp.eq.s32.totalorder %s22, 0
      %p63 = por %p61, %p62
      %p64 = scmp.ne.s32.totalorder %s56, %s58
      %p65 = scmp.eq.s32.totalorder %s27, 1
      %p66 = por %p64, %p65
      %p67 = scmp.ne.s32.totalorder %s58, %s59
      %p68 = scmp.eq.s32.totalorder %s27, 0
      %p69 = por %p67, %p68
      %p70 = scmp.ne.s32.totalorder %s58, %s59
      %p71 = scmp.eq.s32.totalorder %s28, 1
      %p72 = por %p70, %p71
      %p74 = scmp.ne.s32.totalorder %s59, %s73
      %p75 = scmp.eq.s32.totalorder %s28, 0
      %p76 = por %p74, %p75
      %s78 = sadd.s32 %s77, 1
      %p81 = scmp.eq.s32.totalorder %s22, 1
      %p82 = scmp.ne.s32.totalorder %s77, %s79
      %p83 = scmp.eq.s32.totalorder %s22, 0
      %p84 = por %p82, %p83
      %p85 = scmp.ne.s32.totalorder %s77, %s79
      %p86 = scmp.eq.s32.totalorder %s27, 1
      %p87 = por %p85, %p86
      %p88 = scmp.ne.s32.totalorder %s79, %s80
      %p89 = scmp.eq.s32.totalorder %s27, 0
      %p90 = por %p88, %p89
      %p91 = scmp.ne.s32.totalorder %s79, %s80
      %p92 = scmp.eq.s32.totalorder %s28, 1
      %p93 = por %p91, %p92
      %p95 = scmp.ne.s32.totalorder %s80, %s94
      %p96 = scmp.eq.s32.totalorder %s28, 0
      %p97 = por %p95, %p96
      %s99 = sadd.s32 %s98, 1
      %p102 = scmp.eq.s32.totalorder %s22, 1
      %p103 = scmp.ne.s32.totalorder %s98, %s100
      %p104 = scmp.eq.s32.totalorder %s22, 0
      %p105 = por %p103, %p104
      %p106 = scmp.ne.s32.totalorder %s98, %s100
      %p107 = scmp.eq.s32.totalorder %s27, 1
      %p108 = por %p106, %p107
      %p109 = scmp.ne.s32.totalorder %s100, %s101
      %p110 = scmp.eq.s32.totalorder %s27, 0
      %p111 = por %p109, %p110
      %p112 = scmp.ne.s32.totalorder %s100, %s101
      %p113 = scmp.eq.s32.totalorder %s28, 1
      %p114 = por %p112, %p113
      %p116 = scmp.ne.s32.totalorder %s101, %s115
      %p117 = scmp.eq.s32.totalorder %s28, 0
      %p118 = por %p116, %p117
      %s120 = sadd.s32 %s119, 1
      %p123 = scmp.eq.s32.totalorder %s22, 1
      %p124 = scmp.ne.s32.totalorder %s119, %s121
      %p125 = scmp.eq.s32.totalorder %s22, 0
      %p126 = por %p124, %p125
      %p127 = scmp.ne.s32.totalorder %s119, %s121
      %p128 = scmp.eq.s32.totalorder %s27, 1
      %p129 = por %p127, %p128
      %p130 = scmp.ne.s32.totalorder %s121, %s122
      %p131 = scmp.eq.s32.totalorder %s27, 0
      %p132 = por %p130, %p131
      %p133 = scmp.ne.s32.totalorder %s121, %s122
      %p134 = scmp.eq.s32.totalorder %s28, 1
      %p135 = por %p133, %p134
      %p137 = scmp.ne.s32.totalorder %s122, %s136
      %p138 = scmp.eq.s32.totalorder %s28, 0
      %p139 = por %p137, %p138
      %s141 = sadd.s32 %s140, 1
      %p144 = scmp.eq.s32.totalorder %s22, 1
      %p145 = scmp.ne.s32.totalorder %s140, %s142
      %p146 = scmp.eq.s32.totalorder %s22, 0
      %p147 = por %p145, %p146
      %p148 = scmp.ne.s32.totalorder %s140, %s142
      %p149 = scmp.eq.s32.totalorder %s27, 1
      %p150 = por %p148, %p149
      %p151 = scmp.ne.s32.totalorder %s142, %s143
      %p152 = scmp.eq.s32.totalorder %s27, 0
      %p153 = por %p151, %p152
      %p154 = scmp.ne.s32.totalorder %s142, %s143
      %p155 = scmp.eq.s32.totalorder %s28, 1
      %p156 = por %p154, %p155
      %p158 = scmp.ne.s32.totalorder %s143, %s157
      %p159 = scmp.eq.s32.totalorder %s28, 0
      %p160 = por %p158, %p159
      %s162 = sadd.s32 %s161, 1
      %p165 = scmp.eq.s32.totalorder %s22, 1
      %p166 = scmp.ne.s32.totalorder %s161, %s163
      %p167 = scmp.eq.s32.totalorder %s22, 0
      %p168 = por %p166, %p167
      %p169 = scmp.ne.s32.totalorder %s161, %s163
      %p170 = scmp.eq.s32.totalorder %s27, 1
      %p171 = por %p169, %p170
      %p172 = scmp.ne.s32.totalorder %s163, %s164
      %p173 = scmp.eq.s32.totalorder %s27, 0
      %p174 = por %p172, %p173
      %p175 = scmp.ne.s32.totalorder %s163, %s164
      %p176 = scmp.eq.s32.totalorder %s28, 1
      %p177 = por %p175, %p176
      %p179 = scmp.ne.s32.totalorder %s164, %s178
      %p180 = scmp.eq.s32.totalorder %s28, 0
      %p181 = por %p179, %p180
      %s183 = sadd.s32 %s182, 1
      %p186 = scmp.eq.s32.totalorder %s22, 1
      %p187 = scmp.ne.s32.totalorder %s182, %s184
      %p188 = scmp.eq.s32.totalorder %s22, 0
      %p189 = por %p187, %p188
      %p190 = scmp.ne.s32.totalorder %s182, %s184
      %p191 = scmp.eq.s32.totalorder %s27, 1
      %p192 = por %p190, %p191
      %p193 = scmp.ne.s32.totalorder %s184, %s185
      %p194 = scmp.eq.s32.totalorder %s27, 0
      %p195 = por %p193, %p194
      %p196 = scmp.ne.s32.totalorder %s184, %s185
      %p197 = scmp.eq.s32.totalorder %s28, 1
      %p198 = por %p196, %p197
      %p200 = scmp.ne.s32.totalorder %s185, %s199
      %p201 = scmp.eq.s32.totalorder %s28, 0
      %p202 = por %p200, %p201
      %s204 = sadd.s32 %s203, 1
      %p207 = scmp.eq.s32.totalorder %s22, 1
      %p208 = scmp.ne.s32.totalorder %s203, %s205
      %p209 = scmp.eq.s32.totalorder %s22, 0
      %p210 = por %p208, %p209
      %p211 = scmp.ne.s32.totalorder %s203, %s205
      %p212 = scmp.eq.s32.totalorder %s27, 1
      %p213 = por %p211, %p212
      %p214 = scmp.ne.s32.totalorder %s205, %s206
      %p215 = scmp.eq.s32.totalorder %s27, 0
      %p216 = por %p214, %p215
      %p217 = scmp.ne.s32.totalorder %s205, %s206
      %p218 = scmp.eq.s32.totalorder %s28, 1
      %p219 = por %p217, %p218
      %p221 = scmp.ne.s32.totalorder %s206, %s220
      %p222 = scmp.eq.s32.totalorder %s28, 0
      %p223 = por %p221, %p222
      %s225 = sadd.s32 %s224, 1
      %p228 = scmp.eq.s32.totalorder %s22, 1
      %p229 = scmp.ne.s32.totalorder %s224, %s226
      %p230 = scmp.eq.s32.totalorder %s22, 0
      %p231 = por %p229, %p230
      %p232 = scmp.ne.s32.totalorder %s224, %s226
      %p233 = scmp.eq.s32.totalorder %s27, 1
      %p234 = por %p232, %p233
      %p235 = scmp.ne.s32.totalorder %s226, %s227
      %p236 = scmp.eq.s32.totalorder %s27, 0
      %p237 = por %p235, %p236
      %p238 = scmp.ne.s32.totalorder %s226, %s227
      %p239 = scmp.eq.s32.totalorder %s28, 1
      %p240 = por %p238, %p239
      %p242 = scmp.ne.s32.totalorder %s227, %s241
      %p243 = scmp.eq.s32.totalorder %s28, 0
      %p244 = por %p242, %p243
      %s246 = sadd.s32 %s245, 1
      %p249 = scmp.eq.s32.totalorder %s22, 1
      %p250 = scmp.ne.s32.totalorder %s245, %s247
      %p251 = scmp.eq.s32.totalorder %s22, 0
      %p252 = por %p250, %p251
      %p253 = scmp.ne.s32.totalorder %s245, %s247
      %p254 = scmp.eq.s32.totalorder %s27, 1
      %p255 = por %p253, %p254
      %p256 = scmp.ne.s32.totalorder %s247, %s248
      %p257 = scmp.eq.s32.totalorder %s27, 0
      %p258 = por %p256, %p257
      %p259 = scmp.ne.s32.totalorder %s247, %s248
      %p260 = scmp.eq.s32.totalorder %s28, 1
      %p261 = por %p259, %p260
      %p263 = scmp.ne.s32.totalorder %s248, %s262
      %p264 = scmp.eq.s32.totalorder %s28, 0
      %p265 = por %p263, %p264
      %s267 = sadd.s32 %s266, 1
      %p270 = scmp.eq.s32.totalorder %s22, 1
      %p271 = scmp.ne.s32.totalorder %s266, %s268
      %p272 = scmp.eq.s32.totalorder %s22, 0
      %p273 = por %p271, %p272
      %p274 = scmp.ne.s32.totalorder %s266, %s268
      %p275 = scmp.eq.s32.totalorder %s27, 1
      %p276 = por %p274, %p275
      %p277 = scmp.ne.s32.totalorder %s268, %s269
      %p278 = scmp.eq.s32.totalorder %s27, 0
      %p279 = por %p277, %p278
      %p280 = scmp.ne.s32.totalorder %s268, %s269
      %p281 = scmp.eq.s32.totalorder %s28, 1
      %p282 = por %p280, %p281
      %p284 = scmp.ne.s32.totalorder %s269, %s283
      %p285 = scmp.eq.s32.totalorder %s28, 0
      %p286 = por %p284, %p285
      %s288 = sadd.s32 %s287, 1
      %p291 = scmp.eq.s32.totalorder %s22, 1
      %p292 = scmp.ne.s32.totalorder %s287, %s289
      %p293 = scmp.eq.s32.totalorder %s22, 0
      %p294 = por %p292, %p293
      %p295 = scmp.ne.s32.totalorder %s287, %s289
      %p296 = scmp.eq.s32.totalorder %s27, 1
      %p297 = por %p295, %p296
      %p298 = scmp.ne.s32.totalorder %s289, %s290
      %p299 = scmp.eq.s32.totalorder %s27, 0
      %p300 = por %p298, %p299
      %p301 = scmp.ne.s32.totalorder %s289, %s290
      %p302 = scmp.eq.s32.totalorder %s28, 1
      %p303 = por %p301, %p302
      %p305 = scmp.ne.s32.totalorder %s290, %s304
      %p306 = scmp.eq.s32.totalorder %s28, 0
      %p307 = por %p305, %p306
      %s308 = ssub.s32 %s22, %s29
      %p309 = scmp.eq.s32.totalorder %s308, 0
      %s311 = sadd.s32 %s310, 1
      %s312 = scalar_select %p309, %s310, %s311
      %p315 = pneg %p309
      %p316 = scmp.eq.s32.totalorder %s22, 1
      %p317 = por %p315, %p316
      %p318 = scmp.ne.s32.totalorder %s310, %s313
      %p319 = scmp.eq.s32.totalorder %s22, 0
      %p320 = por %p318, %p319
      %p321 = scmp.ne.s32.totalorder %s310, %s313
      %p322 = scmp.eq.s32.totalorder %s27, 1
      %p323 = por %p321, %p322
      %p324 = scmp.ne.s32.totalorder %s313, %s314
      %p325 = scmp.eq.s32.totalorder %s27, 0
      %p326 = por %p324, %p325
      %p327 = scmp.ne.s32.totalorder %s313, %s314
      %p328 = scmp.eq.s32.totalorder %s28, 1
      %p329 = por %p327, %p328
      %p331 = scmp.ne.s32.totalorder %s314, %s330
      %p332 = scmp.eq.s32.totalorder %s28, 0
      %p333 = por %p331, %p332
      %p334 = scmp.le.s32.totalorder 1, %s22
      %p335 = scmp.lt.s32.totalorder %s22, 3
      %p336 = pnand %p334, %p335
      %p337 = pneg %p336
      // Predicated region
      $region9: #{tpu_custom_call.1} parent=5 // pred_check
        _
      $region10: #{tpu_custom_call.1} parent=5 // pred_check_branch
        %339 = sbr.rel (%p336) target = $region12
      $region11: #{tpu_custom_call.1} parent=5 // pred_region
        %s340 = ssub.s32 %s22, 1
        // Predicated region
        $region13: #{tpu_custom_call.1} parent=11 // pred_check
          %p341 = pneg %p69
        $region14: #{tpu_custom_call.1} parent=11 // pred_check_branch
          %343 = sbr.rel (%p341) target = $region16
        $region15: #{tpu_custom_call.1} parent=11 // pred_region
          _
        $region16: #{tpu_custom_call.1} parent=11 // pred_fallthru
          _
        // Predicated region
        $region17: #{tpu_custom_call.1} parent=11 // pred_check
          %p344 = pneg %p90
        $region18: #{tpu_custom_call.1} parent=11 // pred_check_branch
          %346 = sbr.rel (%p344) target = $region20
        $region19: #{tpu_custom_call.1} parent=11 // pred_region
          _
        $region20: #{tpu_custom_call.1} parent=11 // pred_fallthru
          _
        // Predicated region
        $region21: #{tpu_custom_call.1} parent=11 // pred_check
          %p347 = pneg %p111
        $region22: #{tpu_custom_call.1} parent=11 // pred_check_branch
          %349 = sbr.rel (%p347) target = $region24
        $region23: #{tpu_custom_call.1} parent=11 // pred_region
          _
        $region24: #{tpu_custom_call.1} parent=11 // pred_fallthru
          _
        // Predicated region
        $region25: #{tpu_custom_call.1} parent=11 // pred_check
          %p350 = pneg %p132
        $region26: #{tpu_custom_call.1} parent=11 // pred_check_branch
          %352 = sbr.rel (%p350) target = $region28
        $region27: #{tpu_custom_call.1} parent=11 // pred_region
          _
        $region28: #{tpu_custom_call.1} parent=11 // pred_fallthru
          _
        // Predicated region
        $region29: #{tpu_custom_call.1} parent=11 // pred_check
          %p353 = pneg %p153
        $region30: #{tpu_custom_call.1} parent=11 // pred_check_branch
          %355 = sbr.rel (%p353) target = $region32
        $region31: #{tpu_custom_call.1} parent=11 // pred_region
          _
        $region32: #{tpu_custom_call.1} parent=11 // pred_fallthru
          _
        // Predicated region
        $region33: #{tpu_custom_call.1} parent=11 // pred_check
          %p356 = pneg %p174
        $region34: #{tpu_custom_call.1} parent=11 // pred_check_branch
          %358 = sbr.rel (%p356) target = $region36
        $region35: #{tpu_custom_call.1} parent=11 // pred_region
          _
        $region36: #{tpu_custom_call.1} parent=11 // pred_fallthru
          _
        // Predicated region
        $region37: #{tpu_custom_call.1} parent=11 // pred_check
          %p359 = pneg %p195
        $region38: #{tpu_custom_call.1} parent=11 // pred_check_branch
          %361 = sbr.rel (%p359) target = $region40
        $region39: #{tpu_custom_call.1} parent=11 // pred_region
          _
        $region40: #{tpu_custom_call.1} parent=11 // pred_fallthru
          _
        // Predicated region
        $region41: #{tpu_custom_call.1} parent=11 // pred_check
          %p362 = pneg %p216
        $region42: #{tpu_custom_call.1} parent=11 // pred_check_branch
          %364 = sbr.rel (%p362) target = $region44
        $region43: #{tpu_custom_call.1} parent=11 // pred_region
          _
        $region44: #{tpu_custom_call.1} parent=11 // pred_fallthru
          _
        // Predicated region
        $region45: #{tpu_custom_call.1} parent=11 // pred_check
          %p365 = pneg %p237
        $region46: #{tpu_custom_call.1} parent=11 // pred_check_branch
          %367 = sbr.rel (%p365) target = $region48
        $region47: #{tpu_custom_call.1} parent=11 // pred_region
          _
        $region48: #{tpu_custom_call.1} parent=11 // pred_fallthru
          _
        // Predicated region
        $region49: #{tpu_custom_call.1} parent=11 // pred_check
          %p368 = pneg %p258
        $region50: #{tpu_custom_call.1} parent=11 // pred_check_branch
          %370 = sbr.rel (%p368) target = $region52
        $region51: #{tpu_custom_call.1} parent=11 // pred_region
          _
        $region52: #{tpu_custom_call.1} parent=11 // pred_fallthru
          _
        // Predicated region
        $region53: #{tpu_custom_call.1} parent=11 // pred_check
          %p371 = pneg %p279
        $region54: #{tpu_custom_call.1} parent=11 // pred_check_branch
          %373 = sbr.rel (%p371) target = $region56
        $region55: #{tpu_custom_call.1} parent=11 // pred_region
          _
        $region56: #{tpu_custom_call.1} parent=11 // pred_fallthru
          _
        // Predicated region
        $region57: #{tpu_custom_call.1} parent=11 // pred_check
          %p374 = pneg %p300
        $region58: #{tpu_custom_call.1} parent=11 // pred_check_branch
          %376 = sbr.rel (%p374) target = $region60
        $region59: #{tpu_custom_call.1} parent=11 // pred_region
          _
        $region60: #{tpu_custom_call.1} parent=11 // pred_fallthru
          _
      $region12: #{tpu_custom_call.1} parent=5 // pred_fallthru
        _
      %p377 = scmp.lt.s32.totalorder %s22, 2
      // Predicated region
      $region61: #{tpu_custom_call.1} parent=5 // pred_check
        %p378 = pneg %p377
      $region62: #{tpu_custom_call.1} parent=5 // pred_check_branch
        %380 = sbr.rel (%p378) target = $region64
      $region63: #{tpu_custom_call.1} parent=5 // pred_region
        // Predicated region
        $region65: #{tpu_custom_call.1} parent=63 // pred_check
          %p381 = pneg %p42
        $region66: #{tpu_custom_call.1} parent=63 // pred_check_branch
          %383 = sbr.rel (%p381) target = $region68
        $region67: #{tpu_custom_call.1} parent=63 // pred_region
          %p384 = scmp.lt.s32.totalorder %s22, 1
          %s385 = scalar_select %p384, %s22, 1
          %s386 = smul.addr %s385, 8
          %s387 = scalar_lea.vmem %s0, %s386
        $region68: #{tpu_custom_call.1} parent=63 // pred_fallthru
          _
      $region64: #{tpu_custom_call.1} parent=5 // pred_fallthru
        _
      %p388 = scmp.le.s32.totalorder 1, %s22
      %p389 = scmp.lt.s32.totalorder %s22, 3
      %p390 = pnand %p388, %p389
      %p391 = pneg %p390
      // Predicated region
      $region69: #{tpu_custom_call.1} parent=5 // pred_check
        _
      $region70: #{tpu_custom_call.1} parent=5 // pred_check_branch
        %393 = sbr.rel (%p390) target = $region72
      $region71: #{tpu_custom_call.1} parent=5 // pred_region
        %s394 = ssub.s32 %s22, 1
        %p395 = scmp.lt.s32.totalorder %s27, 1
        %s396 = scalar_select %p395, %s27, 1
        %s397 = smul.addr %s396, 8
        %s398 = scalar_lea.vmem %s0, %s397
        %p399 = pneg %p48
        %p400 = pneg %p45
        %p401 = pneg %p69
        %p402 = pneg %p66
        %p403 = pneg %p90
        %p404 = pneg %p87
        %p405 = pneg %p111
        %p406 = pneg %p108
        %p407 = pneg %p132
        %p408 = pneg %p129
        %p409 = pneg %p153
        %p410 = pneg %p150
        %p411 = pneg %p174
        %p412 = pneg %p171
        %p413 = pneg %p195
        %p414 = pneg %p192
        %p415 = pneg %p216
        %p416 = pneg %p213
        %p417 = pneg %p237
        %p418 = pneg %p234
        %p419 = pneg %p258
        %p420 = pneg %p255
        %p421 = pneg %p279
        %p422 = pneg %p276
        %p423 = pneg %p300
        %p424 = pneg %p297
        %p425 = pneg %p326
        %p426 = pneg %p323
        %s427 = sand.u32 %s313, 1
        %s428 = scalar_lea.sflag [#allocation3], %s427
        %s429 = sand.u32 %s313, 1
        %s430 = smul.addr %s429, 8
        %s431 = scalar_lea.vmem [#allocation2], %s430
        %p432 = scmp.lt.s32.totalorder %s27, 1
        %s433 = scalar_select %p432, %s27, 1
        %s434 = smul.addr %s433, 8
        %s435 = scalar_lea.vmem %s0, %s434
        %v437 = vld [vmem:[%s435] sm:$0xff]
        %v438 = vld [vmem:[%s1] sm:$0x1]
        %v439 = vld [vmem:[%s2] sm:$0x1]
        %vm440 = vcmask 261120
        %v441 = vsel %vm440, %v437, 0.0
        %442 = vadd.xlane.f32.xlu0 %v441
        %v443 = vpop.xlane.xlu0 %442
        %v444 = vrcp.pop 32.0
        %v445 = vmul.f32 %v443, %v444
        %v446 = vsub.f32 %v437, %v445
        %v447 = vmul.f32 %v446, %v446
        %v448 = vsel %vm440, %v447, 0.0
        %449 = vadd.xlane.f32.xlu0 %v448
        %v450 = vpop.xlane.xlu0 %449
        %v451 = vmul.f32 %v450, %v444
        %v452 = vadd.f32 %v451, 1e-05
        %v453 = vrsqrt.pop %v452
        %v454 = vmul.f32 %v446, %v453
        %v456 = vlaneseq
        %v457 = vshrl.u32 %v456, 7
        %v458 = vsub.s32 0, %v457
        %v459 = vrot.slane %v438, %v458
        %v461 = vmul.f32 %v454, %v459
        %v463 = vlaneseq
        %v464 = vshrl.u32 %v463, 7
        %v465 = vsub.s32 0, %v464
        %v466 = vrot.slane %v439, %v465
        %v468 = vadd.f32 %v461, %v466
        %v469 = vpack.c.bf16 %v468, %v468
        %v470 = vld [vmem:[%s3] sm:$0xf]
        %v471 = vld [vmem:[%s3 + $0x4] sm:$0xf]
        %v472 = vld [vmem:[%s3 + $0x8] sm:$0xf]
        %v473 = vld [vmem:[%s3 + $0xc] sm:$0xf]
        %v474 = vld [vmem:[%s4] sm:$0x1]
        %v476 = vlaneseq
        %v477 = vshrl.u32 %v476, 7
        %v478 = vsub.s32 0, %v477
        %v479 = vrot.slane %v474, %v478
        %v485 = vunpack.c.l.b16 %v470
        %v486 = vunpack.c.l.b16 %v471
        %v487 = vunpack.c.l.b16 %v472
        %v488 = vunpack.c.l.b16 %v473
        %v489 = vpack.c.b16 %v486, %v485
        %v490 = vpack.c.b16 %v488, %v487
        %v494 = vsel %vm440, %v469, 0
        %496 = vmatprep.subr.bf16.mxu0 0
        %497 = vmatpush1.bf16.msra.mxu0 %v489
        %498 = vmatprep.subr.bf16.mxu0 0
        %499 = vmatpush1.bf16.msra.mxu0 %v490
        %500 = vmatprep.subr.bf16.mxu0 0
        %501 = vmatpush1.bf16.msra.mxu0 0
        %502 = vmatprep.subr.bf16.mxu0 0
        %503 = vmatpush1.bf16.msra.mxu0 0
        %504 = vmatprep.subr.bf16.mxu0 0
        %505 = vmatpush1.bf16.msra.mxu0 0
        %506 = vmatprep.subr.bf16.mxu0 0
        %507 = vmatpush1.bf16.msra.mxu0 0
        %508 = vmatprep.subr.bf16.mxu0 0
        %509 = vmatpush1.bf16.msra.mxu0 0
        %510 = vmatprep.subr.bf16.mxu0 0
        %511 = vmatpush1.bf16.msra.mxu0 0
        %512 = vmatprep.subr.bf16.mxu0 0
        %513 = vmatpush1.bf16.msra.mxu0 0
        %514 = vmatprep.subr.bf16.mxu0 0
        %515 = vmatpush1.bf16.msra.mxu0 0
        %516 = vmatprep.subr.bf16.mxu0 0
        %517 = vmatpush1.bf16.msra.mxu0 0
        %518 = vmatprep.subr.bf16.mxu0 0
        %519 = vmatpush1.bf16.msra.mxu0 0
        %520 = vmatprep.subr.bf16.mxu0 0
        %521 = vmatpush1.bf16.msra.mxu0 0
        %522 = vmatprep.subr.bf16.mxu0 0
        %523 = vmatpush1.bf16.msra.mxu0 0
        %524 = vmatprep.subr.bf16.mxu0 0
        %525 = vmatpush1.bf16.msra.mxu0 0
        %526 = vmatprep.subr.bf16.mxu0 0
        %527 = vmatpush1.bf16.msra.mxu0 0
        %528 = vmatprep.mubr.bf16.mxu0 0
        %529 = vmatmul.mubr.bf16.gmra.mrb[0].mxu0 %v494
        %v530 = vpop.f32.mrb[0].mxu0
        %v531 = vadd.f32 %v479, %v530
        %v532 = vpop.f32.mrb[0].mxu0
        %v533 = vpop.f32.mrb[0].mxu0
        %v534 = vpop.f32.mrb[0].mxu0
        %535 = vdwg.mxu0
        %v536 = vpack.c.bf16 %v531, %v531
        %538 = vrot.lane.b32.xlu0 %v536, 120
        %v539 = vpop.permute.xlu0 %538
        %540 = vrot.lane.b32.xlu0 %v536, 112
        %v541 = vpop.permute.xlu0 %540
        %542 = vrot.lane.b32.xlu0 %v536, 104
        %v543 = vpop.permute.xlu0 %542
        %544 = vrot.lane.b32.xlu0 %v536, 96
        %v545 = vpop.permute.xlu0 %544
        %vm546 = vcmask 64512
        %v548 = vsel %vm546, %v536, 0
        %v551 = vsel %vm546, %v545, 0
        %553 = vmatprep.subr.bf16.mxu0 0
        %554 = vmatpush1.bf16.xpose.msra.mxu0 %v551
        %555 = vmatprep.subr.bf16.mxu0 0
        %556 = vmatpush1.bf16.xpose.msra.mxu0 0
        %557 = vmatprep.subr.bf16.mxu0 0
        %558 = vmatpush1.bf16.xpose.msra.mxu0 0
        %559 = vmatprep.subr.bf16.mxu0 0
        %560 = vmatpush1.bf16.xpose.msra.mxu0 0
        %561 = vmatprep.subr.bf16.mxu0 0
        %562 = vmatpush1.bf16.xpose.msra.mxu0 0
        %563 = vmatprep.subr.bf16.mxu0 0
        %564 = vmatpush1.bf16.xpose.msra.mxu0 0
        %565 = vmatprep.subr.bf16.mxu0 0
        %566 = vmatpush1.bf16.xpose.msra.mxu0 0
        %567 = vmatprep.subr.bf16.mxu0 0
        %568 = vmatpush1.bf16.xpose.msra.mxu0 0
        %569 = vmatprep.subr.bf16.mxu0 0
        %570 = vmatpush1.bf16.xpose.msra.mxu0 0
        %571 = vmatprep.subr.bf16.mxu0 0
        %572 = vmatpush1.bf16.xpose.msra.mxu0 0
        %573 = vmatprep.subr.bf16.mxu0 0
        %574 = vmatpush1.bf16.xpose.msra.mxu0 0
        %575 = vmatprep.subr.bf16.mxu0 0
        %576 = vmatpush1.bf16.xpose.msra.mxu0 0
        %577 = vmatprep.subr.bf16.mxu0 0
        %578 = vmatpush1.bf16.xpose.msra.mxu0 0
        %579 = vmatprep.subr.bf16.mxu0 0
        %580 = vmatpush1.bf16.xpose.msra.mxu0 0
        %581 = vmatprep.subr.bf16.mxu0 0
        %582 = vmatpush1.bf16.xpose.msra.mxu0 0
        %583 = vmatprep.subr.bf16.mxu0 0
        %584 = vmatpush1.bf16.xpose.msra.mxu0 0
        %585 = vmatprep.mubr.bf16.mxu0 0
        %586 = vmatmul.mubr.bf16.gmra.mrb[0].mxu0 %v548
        %v587 = vpop.f32.mrb[0].mxu0
        %v588 = vadd.f32 0.0, %v587
        %v589 = vpop.f32.mrb[0].mxu0
        %v590 = vpop.f32.mrb[0].mxu0
        %v591 = vpop.f32.mrb[0].mxu0
        %592 = vdwg.mxu0
        %593 = vrot.lane.b32.xlu0 %v539, 96
        %v594 = vpop.permute.xlu0 %593
        %v596 = vsel %vm546, %v539, 0
        %v599 = vsel %vm546, %v594, 0
        %601 = vmatprep.subr.bf16.mxu0 0
        %602 = vmatpush1.bf16.xpose.msra.mxu0 %v599
        %603 = vmatprep.subr.bf16.mxu0 0
        %604 = vmatpush1.bf16.xpose.msra.mxu0 0
        %605 = vmatprep.subr.bf16.mxu0 0
        %606 = vmatpush1.bf16.xpose.msra.mxu0 0
        %607 = vmatprep.subr.bf16.mxu0 0
        %608 = vmatpush1.bf16.xpose.msra.mxu0 0
        %609 = vmatprep.subr.bf16.mxu0 0
        %610 = vmatpush1.bf16.xpose.msra.mxu0 0
        %611 = vmatprep.subr.bf16.mxu0 0
        %612 = vmatpush1.bf16.xpose.msra.mxu0 0
        %613 = vmatprep.subr.bf16.mxu0 0
        %614 = vmatpush1.bf16.xpose.msra.mxu0 0
        %615 = vmatprep.subr.bf16.mxu0 0
        %616 = vmatpush1.bf16.xpose.msra.mxu0 0
        %617 = vmatprep.subr.bf16.mxu0 0
        %618 = vmatpush1.bf16.xpose.msra.mxu0 0
        %619 = vmatprep.subr.bf16.mxu0 0
        %620 = vmatpush1.bf16.xpose.msra.mxu0 0
        %621 = vmatprep.subr.bf16.mxu0 0
        %622 = vmatpush1.bf16.xpose.msra.mxu0 0
        %623 = vmatprep.subr.bf16.mxu0 0
        %624 = vmatpush1.bf16.xpose.msra.mxu0 0
        %625 = vmatprep.subr.bf16.mxu0 0
        %626 = vmatpush1.bf16.xpose.msra.mxu0 0
        %627 = vmatprep.subr.bf16.mxu0 0
        %628 = vmatpush1.bf16.xpose.msra.mxu0 0
        %629 = vmatprep.subr.bf16.mxu0 0
        %630 = vmatpush1.bf16.xpose.msra.mxu0 0
        %631 = vmatprep.subr.bf16.mxu0 0
        %632 = vmatpush1.bf16.xpose.msra.mxu0 0
        %633 = vmatprep.mubr.bf16.mxu0 0
        %634 = vmatmul.mubr.bf16.gmra.mrb[0].mxu0 %v596
        %v635 = vpop.f32.mrb[0].mxu0
        %v636 = vadd.f32 0.0, %v635
        %v637 = vpop.f32.mrb[0].mxu0
        %v638 = vpop.f32.mrb[0].mxu0
        %v639 = vpop.f32.mrb[0].mxu0
        %640 = vdwg.mxu0
        %641 = vrot.lane.b32.xlu0 %v541, 96
        %v642 = vpop.permute.xlu0 %641
        %v644 = vsel %vm546, %v541, 0
        %v647 = vsel %vm546, %v642, 0
        %649 = vmatprep.subr.bf16.mxu0 0
        %650 = vmatpush1.bf16.xpose.msra.mxu0 %v647
        %651 = vmatprep.subr.bf16.mxu0 0
        %652 = vmatpush1.bf16.xpose.msra.mxu0 0
        %653 = vmatprep.subr.bf16.mxu0 0
        %654 = vmatpush1.bf16.xpose.msra.mxu0 0
        %655 = vmatprep.subr.bf16.mxu0 0
        %656 = vmatpush1.bf16.xpose.msra.mxu0 0
        %657 = vmatprep.subr.bf16.mxu0 0
        %658 = vmatpush1.bf16.xpose.msra.mxu0 0
        %659 = vmatprep.subr.bf16.mxu0 0
        %660 = vmatpush1.bf16.xpose.msra.mxu0 0
        %661 = vmatprep.subr.bf16.mxu0 0
        %662 = vmatpush1.bf16.xpose.msra.mxu0 0
        %663 = vmatprep.subr.bf16.mxu0 0
        %664 = vmatpush1.bf16.xpose.msra.mxu0 0
        %665 = vmatprep.subr.bf16.mxu0 0
        %666 = vmatpush1.bf16.xpose.msra.mxu0 0
        %667 = vmatprep.subr.bf16.mxu0 0
        %668 = vmatpush1.bf16.xpose.msra.mxu0 0
        %669 = vmatprep.subr.bf16.mxu0 0
        %670 = vmatpush1.bf16.xpose.msra.mxu0 0
        %671 = vmatprep.subr.bf16.mxu0 0
        %672 = vmatpush1.bf16.xpose.msra.mxu0 0
        %673 = vmatprep.subr.bf16.mxu0 0
        %674 = vmatpush1.bf16.xpose.msra.mxu0 0
        %675 = vmatprep.subr.bf16.mxu0 0
        %676 = vmatpush1.bf16.xpose.msra.mxu0 0
        %677 = vmatprep.subr.bf16.mxu0 0
        %678 = vmatpush1.bf16.xpose.msra.mxu0 0
        %679 = vmatprep.subr.bf16.mxu0 0
        %680 = vmatpush1.bf16.xpose.msra.mxu0 0
        %681 = vmatprep.mubr.bf16.mxu0 0
        %682 = vmatmul.mubr.bf16.gmra.mrb[0].mxu0 %v644
        %v683 = vpop.f32.mrb[0].mxu0
        %v684 = vadd.f32 0.0, %v683
        %v685 = vpop.f32.mrb[0].mxu0
        %v686 = vpop.f32.mrb[0].mxu0
        %v687 = vpop.f32.mrb[0].mxu0
        %688 = vdwg.mxu0
        %689 = vrot.lane.b32.xlu0 %v543, 96
        %v690 = vpop.permute.xlu0 %689
        %v692 = vsel %vm546, %v543, 0
        %v695 = vsel %vm546, %v690, 0
        %697 = vmatprep.subr.bf16.mxu0 0
        %698 = vmatpush1.bf16.xpose.msra.mxu0 %v695
        %699 = vmatprep.subr.bf16.mxu0 0
        %700 = vmatpush1.bf16.xpose.msra.mxu0 0
        %701 = vmatprep.subr.bf16.mxu0 0
        %702 = vmatpush1.bf16.xpose.msra.mxu0 0
        %703 = vmatprep.subr.bf16.mxu0 0
        %704 = vmatpush1.bf16.xpose.msra.mxu0 0
        %705 = vmatprep.subr.bf16.mxu0 0
        %706 = vmatpush1.bf16.xpose.msra.mxu0 0
        %707 = vmatprep.subr.bf16.mxu0 0
        %708 = vmatpush1.bf16.xpose.msra.mxu0 0
        %709 = vmatprep.subr.bf16.mxu0 0
        %710 = vmatpush1.bf16.xpose.msra.mxu0 0
        %711 = vmatprep.subr.bf16.mxu0 0
        %712 = vmatpush1.bf16.xpose.msra.mxu0 0
        %713 = vmatprep.subr.bf16.mxu0 0
        %714 = vmatpush1.bf16.xpose.msra.mxu0 0
        %715 = vmatprep.subr.bf16.mxu0 0
        %716 = vmatpush1.bf16.xpose.msra.mxu0 0
        %717 = vmatprep.subr.bf16.mxu0 0
        %718 = vmatpush1.bf16.xpose.msra.mxu0 0
        %719 = vmatprep.subr.bf16.mxu0 0
        %720 = vmatpush1.bf16.xpose.msra.mxu0 0
        %721 = vmatprep.subr.bf16.mxu0 0
        %722 = vmatpush1.bf16.xpose.msra.mxu0 0
        %723 = vmatprep.subr.bf16.mxu0 0
        %724 = vmatpush1.bf16.xpose.msra.mxu0 0
        %725 = vmatprep.subr.bf16.mxu0 0
        %726 = vmatpush1.bf16.xpose.msra.mxu0 0
        %727 = vmatprep.subr.bf16.mxu0 0
        %728 = vmatpush1.bf16.xpose.msra.mxu0 0
        %729 = vmatprep.mubr.bf16.mxu0 0
        %730 = vmatmul.mubr.bf16.gmra.mrb[0].mxu0 %v692
        %v731 = vpop.f32.mrb[0].mxu0
        %v732 = vadd.f32 0.0, %v731
        %v733 = vpop.f32.mrb[0].mxu0
        %v734 = vpop.f32.mrb[0].mxu0
        %v735 = vpop.f32.mrb[0].mxu0
        %736 = vdwg.mxu0
        %v737 = vmul.f32 %v588, 0.35355338
        %v738 = vmul.f32 %v636, 0.35355338
        %v739 = vmul.f32 %v684, 0.35355338
        %v740 = vmul.f32 %v732, 0.35355338
        %v741 = vlaneseq
        %v742 = vshrl.u32 %v741, 7
        %v743 = vlaneseq
        %v744 = vand.u32 %v743, 127
        %vm745 = vcmp.le.s32.totalorder %v744, %v742
        %v746 = vsel %vm745, 1, 0
        %vm747 = vcmp.eq.s32.totalorder %v746, 1
        %v748 = vsel %vm747, %v737, -1e+30
        %v749 = vsel %vm747, %v738, -1e+30
        %v750 = vsel %vm747, %v739, -1e+30
        %v751 = vsel %vm747, %v740, -1e+30
        %v752 = vsel %vm546, %v748, -inf
        %753 = vmax.xlane.f32.xlu0 %v752
        %v754 = vpop.xlane.xlu0 %753
        %v755 = vsel %vm546, %v749, -inf
        %756 = vmax.xlane.f32.xlu0 %v755
        %v757 = vpop.xlane.xlu0 %756
        %v758 = vsel %vm546, %v750, -inf
        %759 = vmax.xlane.f32.xlu0 %v758
        %v760 = vpop.xlane.xlu0 %759
        %v761 = vsel %vm546, %v751, -inf
        %762 = vmax.xlane.f32.xlu0 %v761
        %v763 = vpop.xlane.xlu0 %762
        %v764 = vsub.f32 %v748, %v754
        %v765 = vsub.f32 %v749, %v757
        %v766 = vsub.f32 %v750, %v760
        %v767 = vsub.f32 %v751, %v763
        %v768 = vmul.f32 %v764, 1.442695
        %v769 = vpow.pop %v768
        %v770 = vmul.f32 %v765, 1.442695
        %v771 = vpow.pop %v770
        %v772 = vmul.f32 %v766, 1.442695
        %v773 = vpow.pop %v772
        %v774 = vmul.f32 %v767, 1.442695
        %v775 = vpow.pop %v774
        %v776 = vsel %vm546, %v769, 0.0
        %777 = vadd.xlane.f32.xlu0 %v776
        %v778 = vpop.xlane.xlu0 %777
        %v779 = vsel %vm546, %v771, 0.0
        %780 = vadd.xlane.f32.xlu0 %v779
        %v781 = vpop.xlane.xlu0 %780
        %v782 = vsel %vm546, %v773, 0.0
        %783 = vadd.xlane.f32.xlu0 %v782
        %v784 = vpop.xlane.xlu0 %783
        %v785 = vsel %vm546, %v775, 0.0
        %786 = vadd.xlane.f32.xlu0 %v785
        %v787 = vpop.xlane.xlu0 %786
        %v788 = vrcp.pop %v778
        %v789 = vrcp.pop %v781
        %v790 = vrcp.pop %v784
        %v791 = vrcp.pop %v787
        %v792 = vmul.f32 %v769, %v788
        %v793 = vmul.f32 %v771, %v789
        %v794 = vmul.f32 %v773, %v790
        %v795 = vmul.f32 %v775, %v791
        %v796 = vpack.c.bf16 %v792, %v792
        %v797 = vpack.c.bf16 %v793, %v793
        %v798 = vpack.c.bf16 %v794, %v794
        %v799 = vpack.c.bf16 %v795, %v795
        %800 = vrot.lane.b32.xlu0 %v536, 64
        %v801 = vpop.permute.xlu0 %800
        %v803 = vsel %vm546, %v796, 0
        %vm805 = vcmask 1043456
        %v807 = vsel %vm805, %v801, 0
        %809 = vmatprep.subr.bf16.mxu0 0
        %810 = vmatpush1.bf16.msra.mxu0 %v807
        %811 = vmatprep.subr.bf16.mxu0 0
        %812 = vmatpush1.bf16.msra.mxu0 0
        %813 = vmatprep.subr.bf16.mxu0 0
        %814 = vmatpush1.bf16.msra.mxu0 0
        %815 = vmatprep.subr.bf16.mxu0 0
        %816 = vmatpush1.bf16.msra.mxu0 0
        %817 = vmatprep.subr.bf16.mxu0 0
        %818 = vmatpush1.bf16.msra.mxu0 0
        %819 = vmatprep.subr.bf16.mxu0 0
        %820 = vmatpush1.bf16.msra.mxu0 0
        %821 = vmatprep.subr.bf16.mxu0 0
        %822 = vmatpush1.bf16.msra.mxu0 0
        %823 = vmatprep.subr.bf16.mxu0 0
        %824 = vmatpush1.bf16.msra.mxu0 0
        %825 = vmatprep.subr.bf16.mxu0 0
        %826 = vmatpush1.bf16.msra.mxu0 0
        %827 = vmatprep.subr.bf16.mxu0 0
        %828 = vmatpush1.bf16.msra.mxu0 0
        %829 = vmatprep.subr.bf16.mxu0 0
        %830 = vmatpush1.bf16.msra.mxu0 0
        %831 = vmatprep.subr.bf16.mxu0 0
        %832 = vmatpush1.bf16.msra.mxu0 0
        %833 = vmatprep.subr.bf16.mxu0 0
        %834 = vmatpush1.bf16.msra.mxu0 0
        %835 = vmatprep.subr.bf16.mxu0 0
        %836 = vmatpush1.bf16.msra.mxu0 0
        %837 = vmatprep.subr.bf16.mxu0 0
        %838 = vmatpush1.bf16.msra.mxu0 0
        %839 = vmatprep.subr.bf16.mxu0 0
        %840 = vmatpush1.bf16.msra.mxu0 0
        %841 = vmatprep.mubr.bf16.mxu0 0
        %842 = vmatmul.mubr.bf16.gmra.mrb[0].mxu0 %v803
        %v843 = vpop.f32.mrb[0].mxu0
        %v844 = vadd.f32 0.0, %v843
        %v845 = vpop.f32.mrb[0].mxu0
        %v846 = vpop.f32.mrb[0].mxu0
        %v847 = vpop.f32.mrb[0].mxu0
        %848 = vdwg.mxu0
        %849 = vrot.lane.b32.xlu0 %v539, 64
        %v850 = vpop.permute.xlu0 %849
        %v852 = vsel %vm546, %v797, 0
        %v855 = vsel %vm805, %v850, 0
        %857 = vmatprep.subr.bf16.mxu0 0
        %858 = vmatpush1.bf16.msra.mxu0 %v855
        %859 = vmatprep.subr.bf16.mxu0 0
        %860 = vmatpush1.bf16.msra.mxu0 0
        %861 = vmatprep.subr.bf16.mxu0 0
        %862 = vmatpush1.bf16.msra.mxu0 0
        %863 = vmatprep.subr.bf16.mxu0 0
        %864 = vmatpush1.bf16.msra.mxu0 0
        %865 = vmatprep.subr.bf16.mxu0 0
        %866 = vmatpush1.bf16.msra.mxu0 0
        %867 = vmatprep.subr.bf16.mxu0 0
        %868 = vmatpush1.bf16.msra.mxu0 0
        %869 = vmatprep.subr.bf16.mxu0 0
        %870 = vmatpush1.bf16.msra.mxu0 0
        %871 = vmatprep.subr.bf16.mxu0 0
        %872 = vmatpush1.bf16.msra.mxu0 0
        %873 = vmatprep.subr.bf16.mxu0 0
        %874 = vmatpush1.bf16.msra.mxu0 0
        %875 = vmatprep.subr.bf16.mxu0 0
        %876 = vmatpush1.bf16.msra.mxu0 0
        %877 = vmatprep.subr.bf16.mxu0 0
        %878 = vmatpush1.bf16.msra.mxu0 0
        %879 = vmatprep.subr.bf16.mxu0 0
        %880 = vmatpush1.bf16.msra.mxu0 0
        %881 = vmatprep.subr.bf16.mxu0 0
        %882 = vmatpush1.bf16.msra.mxu0 0
        %883 = vmatprep.subr.bf16.mxu0 0
        %884 = vmatpush1.bf16.msra.mxu0 0
        %885 = vmatprep.subr.bf16.mxu0 0
        %886 = vmatpush1.bf16.msra.mxu0 0
        %887 = vmatprep.subr.bf16.mxu0 0
        %888 = vmatpush1.bf16.msra.mxu0 0
        %889 = vmatprep.mubr.bf16.mxu0 0
        %890 = vmatmul.mubr.bf16.gmra.mrb[0].mxu0 %v852
        %v891 = vpop.f32.mrb[0].mxu0
        %v892 = vadd.f32 0.0, %v891
        %v893 = vpop.f32.mrb[0].mxu0
        %v894 = vpop.f32.mrb[0].mxu0
        %v895 = vpop.f32.mrb[0].mxu0
        %896 = vdwg.mxu0
        %897 = vrot.lane.b32.xlu0 %v541, 64
        %v898 = vpop.permute.xlu0 %897
        %v900 = vsel %vm546, %v798, 0
        %v903 = vsel %vm805, %v898, 0
        %905 = vmatprep.subr.bf16.mxu0 0
        %906 = vmatpush1.bf16.msra.mxu0 %v903
        %907 = vmatprep.subr.bf16.mxu0 0
        %908 = vmatpush1.bf16.msra.mxu0 0
        %909 = vmatprep.subr.bf16.mxu0 0
        %910 = vmatpush1.bf16.msra.mxu0 0
        %911 = vmatprep.subr.bf16.mxu0 0
        %912 = vmatpush1.bf16.msra.mxu0 0
        %913 = vmatprep.subr.bf16.mxu0 0
        %914 = vmatpush1.bf16.msra.mxu0 0
        %915 = vmatprep.subr.bf16.mxu0 0
        %916 = vmatpush1.bf16.msra.mxu0 0
        %917 = vmatprep.subr.bf16.mxu0 0
        %918 = vmatpush1.bf16.msra.mxu0 0
        %919 = vmatprep.subr.bf16.mxu0 0
        %920 = vmatpush1.bf16.msra.mxu0 0
        %921 = vmatprep.subr.bf16.mxu0 0
        %922 = vmatpush1.bf16.msra.mxu0 0
        %923 = vmatprep.subr.bf16.mxu0 0
        %924 = vmatpush1.bf16.msra.mxu0 0
        %925 = vmatprep.subr.bf16.mxu0 0
        %926 = vmatpush1.bf16.msra.mxu0 0
        %927 = vmatprep.subr.bf16.mxu0 0
        %928 = vmatpush1.bf16.msra.mxu0 0
        %929 = vmatprep.subr.bf16.mxu0 0
        %930 = vmatpush1.bf16.msra.mxu0 0
        %931 = vmatprep.subr.bf16.mxu0 0
        %932 = vmatpush1.bf16.msra.mxu0 0
        %933 = vmatprep.subr.bf16.mxu0 0
        %934 = vmatpush1.bf16.msra.mxu0 0
        %935 = vmatprep.subr.bf16.mxu0 0
        %936 = vmatpush1.bf16.msra.mxu0 0
        %937 = vmatprep.mubr.bf16.mxu0 0
        %938 = vmatmul.mubr.bf16.gmra.mrb[0].mxu0 %v900
        %v939 = vpop.f32.mrb[0].mxu0
        %v940 = vadd.f32 0.0, %v939
        %v941 = vpop.f32.mrb[0].mxu0
        %v942 = vpop.f32.mrb[0].mxu0
        %v943 = vpop.f32.mrb[0].mxu0
        %944 = vdwg.mxu0
        %945 = vrot.lane.b32.xlu0 %v543, 64
        %v946 = vpop.permute.xlu0 %945
        %v948 = vsel %vm546, %v799, 0
        %v951 = vsel %vm805, %v946, 0
        %953 = vmatprep.subr.bf16.mxu0 0
        %954 = vmatpush1.bf16.msra.mxu0 %v951
        %955 = vmatprep.subr.bf16.mxu0 0
        %956 = vmatpush1.bf16.msra.mxu0 0
        %957 = vmatprep.subr.bf16.mxu0 0
        %958 = vmatpush1.bf16.msra.mxu0 0
        %959 = vmatprep.subr.bf16.mxu0 0
        %960 = vmatpush1.bf16.msra.mxu0 0
        %961 = vmatprep.subr.bf16.mxu0 0
        %962 = vmatpush1.bf16.msra.mxu0 0
        %963 = vmatprep.subr.bf16.mxu0 0
        %964 = vmatpush1.bf16.msra.mxu0 0
        %965 = vmatprep.subr.bf16.mxu0 0
        %966 = vmatpush1.bf16.msra.mxu0 0
        %967 = vmatprep.subr.bf16.mxu0 0
        %968 = vmatpush1.bf16.msra.mxu0 0
        %969 = vmatprep.subr.bf16.mxu0 0
        %970 = vmatpush1.bf16.msra.mxu0 0
        %971 = vmatprep.subr.bf16.mxu0 0
        %972 = vmatpush1.bf16.msra.mxu0 0
        %973 = vmatprep.subr.bf16.mxu0 0
        %974 = vmatpush1.bf16.msra.mxu0 0
        %975 = vmatprep.subr.bf16.mxu0 0
        %976 = vmatpush1.bf16.msra.mxu0 0
        %977 = vmatprep.subr.bf16.mxu0 0
        %978 = vmatpush1.bf16.msra.mxu0 0
        %979 = vmatprep.subr.bf16.mxu0 0
        %980 = vmatpush1.bf16.msra.mxu0 0
        %981 = vmatprep.subr.bf16.mxu0 0
        %982 = vmatpush1.bf16.msra.mxu0 0
        %983 = vmatprep.subr.bf16.mxu0 0
        %984 = vmatpush1.bf16.msra.mxu0 0
        %985 = vmatprep.mubr.bf16.mxu0 0
        %986 = vmatmul.mubr.bf16.gmra.mrb[0].mxu0 %v948
        %v987 = vpop.f32.mrb[0].mxu0
        %v988 = vadd.f32 0.0, %v987
        %v989 = vpop.f32.mrb[0].mxu0
        %v990 = vpop.f32.mrb[0].mxu0
        %v991 = vpop.f32.mrb[0].mxu0
        %992 = vdwg.mxu0
        %994 = vrot.lane.b32.xlu0 %v892, 8
        %v995 = vpop.permute.xlu0 %994
        %998 = vrot.lane.b32.xlu0 %v940, 16
        %v999 = vpop.permute.xlu0 %998
        %1002 = vrot.lane.b32.xlu0 %v988, 24
        %v1003 = vpop.permute.xlu0 %1002
        %v1005 = vsel %vm546, %v844, %v995
        %vm1006 = vcmask 130048
        %v1007 = vsel %vm1006, %v1005, %v999
        %vm1008 = vcmask 195584
        %v1009 = vsel %vm1008, %v1007, %v1003
        %v1010 = vpack.c.bf16 %v1009, %v1009
        %v1011 = vld [vmem:[%s5] sm:$0xf]
        %v1012 = vld [vmem:[%s5 + $0x4] sm:$0xf]
        %v1013 = vld [vmem:[%s5 + $0x8] sm:$0xf]
        %v1014 = vld [vmem:[%s5 + $0xc] sm:$0xf]
        %v1015 = vld [vmem:[%s6] sm:$0x1]
        %v1017 = vlaneseq
        %v1018 = vshrl.u32 %v1017, 7
        %v1019 = vsub.s32 0, %v1018
        %v1020 = vrot.slane %v1015, %v1019
        %v1026 = vunpack.c.l.b16 %v1011
        %v1027 = vunpack.c.l.b16 %v1012
        %v1028 = vunpack.c.l.b16 %v1013
        %v1029 = vunpack.c.l.b16 %v1014
        %v1030 = vpack.c.b16 %v1027, %v1026
        %v1031 = vpack.c.b16 %v1029, %v1028
        %v1035 = vsel %vm440, %v1010, 0
        %1037 = vmatprep.subr.bf16.mxu0 0
        %1038 = vmatpush1.bf16.msra.mxu0 %v1030
        %1039 = vmatprep.subr.bf16.mxu0 0
        %1040 = vmatpush1.bf16.msra.mxu0 %v1031
        %1041 = vmatprep.subr.bf16.mxu0 0
        %1042 = vmatpush1.bf16.msra.mxu0 0
        %1043 = vmatprep.subr.bf16.mxu0 0
        %1044 = vmatpush1.bf16.msra.mxu0 0
        %1045 = vmatprep.subr.bf16.mxu0 0
        %1046 = vmatpush1.bf16.msra.mxu0 0
        %1047 = vmatprep.subr.bf16.mxu0 0
        %1048 = vmatpush1.bf16.msra.mxu0 0
        %1049 = vmatprep.subr.bf16.mxu0 0
        %1050 = vmatpush1.bf16.msra.mxu0 0
        %1051 = vmatprep.subr.bf16.mxu0 0
        %1052 = vmatpush1.bf16.msra.mxu0 0
        %1053 = vmatprep.subr.bf16.mxu0 0
        %1054 = vmatpush1.bf16.msra.mxu0 0
        %1055 = vmatprep.subr.bf16.mxu0 0
        %1056 = vmatpush1.bf16.msra.mxu0 0
        %1057 = vmatprep.subr.bf16.mxu0 0
        %1058 = vmatpush1.bf16.msra.mxu0 0
        %1059 = vmatprep.subr.bf16.mxu0 0
        %1060 = vmatpush1.bf16.msra.mxu0 0
        %1061 = vmatprep.subr.bf16.mxu0 0
        %1062 = vmatpush1.bf16.msra.mxu0 0
        %1063 = vmatprep.subr.bf16.mxu0 0
        %1064 = vmatpush1.bf16.msra.mxu0 0
        %1065 = vmatprep.subr.bf16.mxu0 0
        %1066 = vmatpush1.bf16.msra.mxu0 0
        %1067 = vmatprep.subr.bf16.mxu0 0
        %1068 = vmatpush1.bf16.msra.mxu0 0
        %1069 = vmatprep.mubr.bf16.mxu0 0
        %1070 = vmatmul.mubr.bf16.gmra.mrb[0].mxu0 %v1035
        %v1071 = vpop.f32.mrb[0].mxu0
        %v1072 = vadd.f32 %v1020, %v1071
        %v1073 = vpop.f32.mrb[0].mxu0
        %v1074 = vpop.f32.mrb[0].mxu0
        %v1075 = vpop.f32.mrb[0].mxu0
        %1076 = vdwg.mxu0
        %v1077 = vadd.f32 %v437, %v1072
        %v1078 = vld [vmem:[%s7] sm:$0x1]
        %v1079 = vld [vmem:[%s8] sm:$0x1]
        %v1080 = vsel %vm440, %v1077, 0.0
        %1081 = vadd.xlane.f32.xlu0 %v1080
        %v1082 = vpop.xlane.xlu0 %1081
        %v1083 = vmul.f32 %v1082, %v444
        %v1084 = vsub.f32 %v1077, %v1083
        %v1085 = vmul.f32 %v1084, %v1084
        %v1086 = vsel %vm440, %v1085, 0.0
        %1087 = vadd.xlane.f32.xlu0 %v1086
        %v1088 = vpop.xlane.xlu0 %1087
        %v1089 = vmul.f32 %v1088, %v444
        %v1090 = vadd.f32 %v1089, 1e-05
        %v1091 = vrsqrt.pop %v1090
        %v1092 = vmul.f32 %v1084, %v1091
        %v1094 = vlaneseq
        %v1095 = vshrl.u32 %v1094, 7
        %v1096 = vsub.s32 0, %v1095
        %v1097 = vrot.slane %v1078, %v1096
        %v1099 = vmul.f32 %v1092, %v1097
        %v1101 = vlaneseq
        %v1102 = vshrl.u32 %v1101, 7
        %v1103 = vsub.s32 0, %v1102
        %v1104 = vrot.slane %v1079, %v1103
        %v1106 = vadd.f32 %v1099, %v1104
        %v1107 = vpack.c.bf16 %v1106, %v1106
        %v1108 = vld [vmem:[%s9] sm:$0xf]
        %v1109 = vld [vmem:[%s9 + $0x4] sm:$0xf]
        %v1110 = vld [vmem:[%s9 + $0x8] sm:$0xf]
        %v1111 = vld [vmem:[%s9 + $0xc] sm:$0xf]
        %v1112 = vld [vmem:[%s10] sm:$0x1]
        %v1114 = vlaneseq
        %v1115 = vshrl.u32 %v1114, 7
        %v1116 = vsub.s32 0, %v1115
        %v1117 = vrot.slane %v1112, %v1116
        %v1123 = vunpack.c.l.b16 %v1108
        %v1124 = vunpack.c.l.b16 %v1109
        %v1125 = vunpack.c.l.b16 %v1110
        %v1126 = vunpack.c.l.b16 %v1111
        %v1127 = vpack.c.b16 %v1124, %v1123
        %v1128 = vpack.c.b16 %v1126, %v1125
        %v1132 = vsel %vm440, %v1107, 0
        %1134 = vmatprep.subr.bf16.mxu0 0
        %1135 = vmatpush1.bf16.msra.mxu0 %v1127
        %1136 = vmatprep.subr.bf16.mxu0 0
        %1137 = vmatpush1.bf16.msra.mxu0 %v1128
        %1138 = vmatprep.subr.bf16.mxu0 0
        %1139 = vmatpush1.bf16.msra.mxu0 0
        %1140 = vmatprep.subr.bf16.mxu0 0
        %1141 = vmatpush1.bf16.msra.mxu0 0
        %1142 = vmatprep.subr.bf16.mxu0 0
        %1143 = vmatpush1.bf16.msra.mxu0 0
        %1144 = vmatprep.subr.bf16.mxu0 0
        %1145 = vmatpush1.bf16.msra.mxu0 0
        %1146 = vmatprep.subr.bf16.mxu0 0
        %1147 = vmatpush1.bf16.msra.mxu0 0
        %1148 = vmatprep.subr.bf16.mxu0 0
        %1149 = vmatpush1.bf16.msra.mxu0 0
        %1150 = vmatprep.subr.bf16.mxu0 0
        %1151 = vmatpush1.bf16.msra.mxu0 0
        %1152 = vmatprep.subr.bf16.mxu0 0
        %1153 = vmatpush1.bf16.msra.mxu0 0
        %1154 = vmatprep.subr.bf16.mxu0 0
        %1155 = vmatpush1.bf16.msra.mxu0 0
        %1156 = vmatprep.subr.bf16.mxu0 0
        %1157 = vmatpush1.bf16.msra.mxu0 0
        %1158 = vmatprep.subr.bf16.mxu0 0
        %1159 = vmatpush1.bf16.msra.mxu0 0
        %1160 = vmatprep.subr.bf16.mxu0 0
        %1161 = vmatpush1.bf16.msra.mxu0 0
        %1162 = vmatprep.subr.bf16.mxu0 0
        %1163 = vmatpush1.bf16.msra.mxu0 0
        %1164 = vmatprep.subr.bf16.mxu0 0
        %1165 = vmatpush1.bf16.msra.mxu0 0
        %1166 = vmatprep.mubr.bf16.mxu0 0
        %1167 = vmatmul.mubr.bf16.gmra.mrb[0].mxu0 %v1132
        %v1168 = vpop.f32.mrb[0].mxu0
        %v1169 = vadd.f32 %v1117, %v1168
        %v1170 = vpop.f32.mrb[0].mxu0
        %v1171 = vpop.f32.mrb[0].mxu0
        %v1172 = vpop.f32.mrb[0].mxu0
        %1173 = vdwg.mxu0
        %v1174 = vmul.f32 %v1169, 0.5
        %v1175 = vmul.f32 %v1169, 0.044715
        %v1176 = vmul.f32 %v1175, %v1169
        %v1177 = vmul.f32 %v1176, %v1169
        %v1178 = vadd.f32 %v1169, %v1177
        %v1179 = vmul.f32 %v1178, 0.7978846
        %v1180 = vtanh.pop %v1179
        %v1181 = vadd.f32 %v1180, 1.0
        %v1182 = vmul.f32 %v1174, %v1181
        %v1183 = vpack.c.bf16 %v1182, %v1182
        %v1184 = vld [vmem:[%s11] sm:$0xf]
        %v1185 = vld [vmem:[%s11 + $0x4] sm:$0xf]
        %v1186 = vld [vmem:[%s11 + $0x8] sm:$0xf]
        %v1187 = vld [vmem:[%s11 + $0xc] sm:$0xf]
        %v1188 = vld [vmem:[%s11 + $0x10] sm:$0xf]
        %v1189 = vld [vmem:[%s11 + $0x14] sm:$0xf]
        %v1190 = vld [vmem:[%s11 + $0x18] sm:$0xf]
        %v1191 = vld [vmem:[%s11 + $0x1c] sm:$0xf]
        %v1192 = vld [vmem:[%s11 + $0x20] sm:$0xf]
        %v1193 = vld [vmem:[%s11 + $0x24] sm:$0xf]
        %v1194 = vld [vmem:[%s11 + $0x28] sm:$0xf]
        %v1195 = vld [vmem:[%s11 + $0x2c] sm:$0xf]
        %v1196 = vld [vmem:[%s11 + $0x30] sm:$0xf]
        %v1197 = vld [vmem:[%s11 + $0x34] sm:$0xf]
        %v1198 = vld [vmem:[%s11 + $0x38] sm:$0xf]
        %v1199 = vld [vmem:[%s11 + $0x3c] sm:$0xf]
        %v1200 = vld [vmem:[%s12] sm:$0x1]
        %v1202 = vlaneseq
        %v1203 = vshrl.u32 %v1202, 7
        %v1204 = vsub.s32 0, %v1203
        %v1205 = vrot.slane %v1200, %v1204
        %v1223 = vunpack.c.l.b16 %v1184
        %v1224 = vunpack.c.l.b16 %v1185
        %v1225 = vunpack.c.l.b16 %v1186
        %v1226 = vunpack.c.l.b16 %v1187
        %v1227 = vunpack.c.l.b16 %v1188
        %v1228 = vunpack.c.l.b16 %v1189
        %v1229 = vunpack.c.l.b16 %v1190
        %v1230 = vunpack.c.l.b16 %v1191
        %v1231 = vunpack.c.l.b16 %v1192
        %v1232 = vunpack.c.l.b16 %v1193
        %v1233 = vunpack.c.l.b16 %v1194
        %v1234 = vunpack.c.l.b16 %v1195
        %v1235 = vunpack.c.l.b16 %v1196
        %v1236 = vunpack.c.l.b16 %v1197
        %v1237 = vunpack.c.l.b16 %v1198
        %v1238 = vunpack.c.l.b16 %v1199
        %v1239 = vpack.c.b16 %v1224, %v1223
        %v1240 = vpack.c.b16 %v1226, %v1225
        %v1241 = vpack.c.b16 %v1228, %v1227
        %v1242 = vpack.c.b16 %v1230, %v1229
        %v1243 = vpack.c.b16 %v1232, %v1231
        %v1244 = vpack.c.b16 %v1234, %v1233
        %v1245 = vpack.c.b16 %v1236, %v1235
        %v1246 = vpack.c.b16 %v1238, %v1237
        %1255 = vmatprep.subr.bf16.mxu0 0
        %1256 = vmatpush1.bf16.msra.mxu0 %v1239
        %1257 = vmatprep.subr.bf16.mxu0 0
        %1258 = vmatpush1.bf16.msra.mxu0 %v1240
        %1259 = vmatprep.subr.bf16.mxu0 0
        %1260 = vmatpush1.bf16.msra.mxu0 %v1241
        %1261 = vmatprep.subr.bf16.mxu0 0
        %1262 = vmatpush1.bf16.msra.mxu0 %v1242
        %1263 = vmatprep.subr.bf16.mxu0 0
        %1264 = vmatpush1.bf16.msra.mxu0 %v1243
        %1265 = vmatprep.subr.bf16.mxu0 0
        %1266 = vmatpush1.bf16.msra.mxu0 %v1244
        %1267 = vmatprep.subr.bf16.mxu0 0
        %1268 = vmatpush1.bf16.msra.mxu0 %v1245
        %1269 = vmatprep.subr.bf16.mxu0 0
        %1270 = vmatpush1.bf16.msra.mxu0 %v1246
        %1271 = vmatprep.subr.bf16.mxu0 0
        %1272 = vmatpush1.bf16.msra.mxu0 0
        %1273 = vmatprep.subr.bf16.mxu0 0
        %1274 = vmatpush1.bf16.msra.mxu0 0
        %1275 = vmatprep.subr.bf16.mxu0 0
        %1276 = vmatpush1.bf16.msra.mxu0 0
        %1277 = vmatprep.subr.bf16.mxu0 0
        %1278 = vmatpush1.bf16.msra.mxu0 0
        %1279 = vmatprep.subr.bf16.mxu0 0
        %1280 = vmatpush1.bf16.msra.mxu0 0
        %1281 = vmatprep.subr.bf16.mxu0 0
        %1282 = vmatpush1.bf16.msra.mxu0 0
        %1283 = vmatprep.subr.bf16.mxu0 0
        %1284 = vmatpush1.bf16.msra.mxu0 0
        %1285 = vmatprep.subr.bf16.mxu0 0
        %1286 = vmatpush1.bf16.msra.mxu0 0
        %1287 = vmatprep.mubr.bf16.mxu0 0
        %1288 = vmatmul.mubr.bf16.gmra.mrb[0].mxu0 %v1183
        %v1289 = vpop.f32.mrb[0].mxu0
        %v1290 = vadd.f32 %v1205, %v1289
        %v1291 = vpop.f32.mrb[0].mxu0
        %v1292 = vpop.f32.mrb[0].mxu0
        %v1293 = vpop.f32.mrb[0].mxu0
        %1294 = vdwg.mxu0
        %v1295 = vadd.f32 %v1077, %v1290
        %1296 = vst.msk [vmem:[%s431] sm:$0xff] %vm440, %v1295
        %s1297 = sand.u32 %s313, 1
        %s1298 = scalar_lea.sflag [#allocation3], %s1297
        %s1299 = sand.u32 %s313, 1
        %s1300 = smul.addr %s1299, 8
        %s1301 = scalar_lea.vmem [#allocation2], %s1300
        // Predicated region
        $region73: #{tpu_custom_call.1} parent=71 // pred_check
          %p1302 = pneg %p323
        $region74: #{tpu_custom_call.1} parent=71 // pred_check_branch
          %1304 = sbr.rel (%p1302) target = $region76
        $region75: #{tpu_custom_call.1} parent=71 // pred_region
          %s1306 = ssub.s32 128, 128
          %1307 = vsyncadd %s1298, %s1306
          %s1308 = smul.addr %s27, 128
          %s1309 = scalar_lea.hbm %s13, %s1308
          %s1311 = sshll.u32 %s1301, 4
          %s1312 = int_to_ptr.vmem [resolvable:$true] %s1311
          %1314 = dma.vmem_to_hbm [thread:$0]  %s1312, 128, %s1309, %s1298
        $region76: #{tpu_custom_call.1} parent=71 // pred_fallthru
          _
      $region72: #{tpu_custom_call.1} parent=5 // pred_fallthru
        _
      %p1315 = scmp.le.s32.totalorder 2, %s22
      // Predicated region
      $region77: #{tpu_custom_call.1} parent=5 // pred_check
        %p1316 = pneg %p1315
      $region78: #{tpu_custom_call.1} parent=5 // pred_check_branch
        %1318 = sbr.rel (%p1316) target = $region80
      $region79: #{tpu_custom_call.1} parent=5 // pred_region
        %s1319 = ssub.s32 %s22, 2
        // Predicated region
        $region81: #{tpu_custom_call.1} parent=79 // pred_check
          %p1320 = pneg %p329
        $region82: #{tpu_custom_call.1} parent=79 // pred_check_branch
          %1322 = sbr.rel (%p1320) target = $region84
        $region83: #{tpu_custom_call.1} parent=79 // pred_region
          %s1323 = sand.u32 %s314, 1
          %s1324 = scalar_lea.sflag [#allocation3], %s1323
          %s1325 = sand.u32 %s314, 1
          %s1326 = smul.addr %s1325, 8
          %s1327 = scalar_lea.vmem [#allocation2], %s1326
          %1328 = dma.done %s1324, 128
        $region84: #{tpu_custom_call.1} parent=79 // pred_fallthru
          _
      $region80: #{tpu_custom_call.1} parent=5 // pred_fallthru
        _
    $region6: #{tpu_custom_call.1} parent=1 // loop_footer
      %s26 = sadd.s32 1, %s22
    $region7: #{tpu_custom_call.1} parent=1 // loop_footer_branch
      %21 = sbr.rel target = $region3
    $region8: #{tpu_custom_call.1} parent=1 // loop_exit
      _
    %1329 = vsyncpa [#allocation3], 1
    %s1330 = scalar_lea.sflag [#allocation3], 1
    %1331 = vsyncpa %s1330, 1

</llo_original>
